<compile_context>
chip_gen: v7x
topology: tpu7x:2x2x1
jax: 0.10.0
libtpu: 0.0.40
codegen_flags: <defaults>
</compile_context>

<pallas_src>
import functools
import math

import jax
import jax.numpy as jnp
from jax import lax
from jax.experimental import pallas as pl
from jax.experimental.pallas import tpu as pltpu


def _round_up(v, m):
    return ((v + m - 1) // m) * m


def _layernorm(x, eps):
    mu = jnp.mean(x, axis=-1, keepdims=True)
    var = jnp.mean((x - mu) ** 2, axis=-1, keepdims=True)
    return (x - mu) * lax.rsqrt(var + eps)


def _gelu_tanh(x):
    # GELU(approximate='tanh'), f32 elementwise.
    c = math.sqrt(2.0 / math.pi)
    return 0.5 * x * (1.0 + jnp.tanh(c * (x + 0.044715 * x * x * x)))


def _cross_attn_block_kernel(
    x_ref, ctx_ref,
    cw_ref, cb_ref,                 # norm_context affine (1, Dc) f32
    wq_ref, bq_ref,                 # (D, inner_p) bf16 (scale folded), (1, inner_p) f32
    wk_ref, bk_ref,                 # (Dc, inner_p) bf16, (1, inner_p) f32
    wv_ref, bv_ref,                 # (Dc, inner_p) bf16, (1, inner_p) f32
    wo_ref, bo_ref,                 # (inner_p, D) bf16, (1, D) f32
    w1_ref, b1_ref,                 # (D, Mh) bf16, (1, Mh) f32
    w2_ref, b2_ref,                 # (Mh, D) bf16, (1, D) f32
    out_ref,
    k_cache, v_cache, q_buf, o_buf,  # VMEM scratch
    *, num_heads, dim_head_padded):
    f32 = jnp.float32
    bf16 = jnp.bfloat16
    dh = dim_head_padded

    # K/V depend only on (batch, context): compute once per batch index.  The
    # tile axis (grid axis 1) is "arbitrary"/sequential, so t == 0 runs first
    # for every b on the owning core and the cache is valid for later tiles.
    @pl.when(pl.program_id(1) == 0)
    def _compute_kv():
        ctx = ctx_ref[0]                                          # (N2, Dc) f32
        c1 = _layernorm(ctx, 1e-5) * cw_ref[0] + cb_ref[0]
        c1b = c1.astype(bf16)
        k = jnp.dot(c1b, wk_ref[...], preferred_element_type=f32) + bk_ref[0]
        v = jnp.dot(c1b, wv_ref[...], preferred_element_type=f32) + bv_ref[0]
        k_cache[...] = k.astype(bf16)
        v_cache[...] = v.astype(bf16)

    x = x_ref[0]                                                  # (Tn1, D) f32

    # --- cross-attention branch (softmax scale pre-folded into wq/bq) ---
    x1 = _layernorm(x, 1e-6)
    q = jnp.dot(x1.astype(bf16), wq_ref[...], preferred_element_type=f32) + bq_ref[0]
    q_buf[...] = q.astype(bf16)

    for h in range(num_heads):                  # static, lane-aligned slices
        lo = h * dh
        qh = q_buf[:, lo:lo + dh]
        kh = k_cache[:, lo:lo + dh]
        vh = v_cache[:, lo:lo + dh]
        # q @ k^T without an explicit transpose (rhs contraction on last dim).
        s = lax.dot_general(qh, kh, (((1,), (1,)), ((), ())),
                            preferred_element_type=f32)           # (Tn1, N2)
        s = s - jnp.max(s, axis=-1, keepdims=True)
        p = jnp.exp(s)
        # approx reciprocal -> rows sum to ~1 (not exactly); within tolerance.
        p = p * pl.reciprocal(jnp.sum(p, axis=-1, keepdims=True), approx=True)
        oh = jnp.dot(p.astype(bf16), vh, preferred_element_type=f32)  # (Tn1, dh)
        o_buf[:, lo:lo + dh] = oh.astype(bf16)

    # One wide-K output projection instead of per-head matmuls + f32 adds.
    attn = jnp.dot(o_buf[...], wo_ref[...], preferred_element_type=f32) + bo_ref[0]
    x = x + attn

    # --- MLP branch ---
    x2 = _layernorm(x, 1e-6)
    h1 = jnp.dot(x2.astype(bf16), w1_ref[...], preferred_element_type=f32) + b1_ref[0]
    h1 = _gelu_tanh(h1)
    h2 = jnp.dot(h1.astype(bf16), w2_ref[...], preferred_element_type=f32) + b2_ref[0]

    out_ref[0] = (x + h2).astype(out_ref.dtype)


@functools.lru_cache(maxsize=None)
def _vmem_limit_bytes():
    try:
        cap = int(pltpu.get_tpu_info().vmem_capacity_bytes)
    except Exception:
        return 48 * 1024 * 1024
    if cap >= 128 * 1024 * 1024:      # v5e / v6e
        return 96 * 1024 * 1024
    return 48 * 1024 * 1024           # v7x (64 MiB physical)


def _pick_tile_n1(n1, max_tile):
    """Tile size for the N1 axis.  Always a multiple of 8; never a giant
    fallback block -- the wrapper zero-pads N1 to a multiple of the tile."""
    if n1 <= max_tile:
        return _round_up(n1, 8)
    for t in range(max_tile, 7, -8):   # prefer an exact divisor of N1
        if n1 % t == 0:
            return t
    return max_tile                    # host pads N1 up to a multiple of this


@functools.lru_cache(maxsize=None)
def _supports_single_buffered_inputs():
    """Feature-detect BlockSpec(pipeline_mode=pl.Buffered(1)) via a tiny AOT compile."""
    if not hasattr(pl, "Buffered"):
        return False

    def _probe(x_ref, w_ref, o_ref):
        o_ref[...] = x_ref[...] + w_ref[...]

    try:
        call = pl.pallas_call(
            _probe,
            out_shape=jax.ShapeDtypeStruct((16, 128), jnp.float32),
            grid=(2,),
            in_specs=[
                pl.BlockSpec((8, 128), lambda i: (i, 0),
                             pipeline_mode=pl.Buffered(1)),
                pl.BlockSpec((8, 128), lambda i: (0, 0),
                             pipeline_mode=pl.Buffered(1)),
            ],
            out_specs=pl.BlockSpec((8, 128), lambda i: (i, 0)),
        )
        x = jnp.zeros((16, 128), jnp.float32)
        w = jnp.zeros((8, 128), jnp.float32)
        jax.jit(call).lower(x, w).compile()
        return True
    except Exception:
        return False


@functools.lru_cache(maxsize=None)
def _build_call(*, B, N1, N2, D, Dc, inner_p, Mh, tile_n1,
                num_heads, dh_p, single_buffer, vmem_limit):
    n1_tiles = N1 // tile_n1

    def const_spec(shape):
        nd = len(shape)
        kwargs = {}
        if single_buffer:
            # Constant index_map across the grid -> single buffer suffices.
            kwargs["pipeline_mode"] = pl.Buffered(1)
        return pl.BlockSpec(shape, lambda b, t, _nd=nd: (0,) * _nd, **kwargs)

    ctx_kwargs = {}
    if single_buffer:
        # Context block index only changes with b (slow axis).
        ctx_kwargs["pipeline_mode"] = pl.Buffered(1)

    kernel = functools.partial(_cross_attn_block_kernel,
                               num_heads=num_heads, dim_head_padded=dh_p)

    call = pl.pallas_call(
        kernel,
        out_shape=jax.ShapeDtypeStruct((B, N1, D), jnp.float32),
        grid_spec=pltpu.PrefetchScalarGridSpec(
            num_scalar_prefetch=0,
            grid=(B, n1_tiles),
            in_specs=[
                pl.BlockSpec((1, tile_n1, D), lambda b, t: (b, t, 0)),            # x tile
                pl.BlockSpec((1, N2, Dc), lambda b, t: (b, 0, 0), **ctx_kwargs),  # context
                const_spec((1, Dc)),            # norm_context weight
                const_spec((1, Dc)),            # norm_context bias
                const_spec((D, inner_p)),       # wq^T (scale folded, padded)
                const_spec((1, inner_p)),       # bq  (scale folded, padded)
                const_spec((Dc, inner_p)),      # wk^T (padded)
                const_spec((1, inner_p)),       # bk  (padded)
                const_spec((Dc, inner_p)),      # wv^T (padded)
                const_spec((1, inner_p)),       # bv  (padded)
                const_spec((inner_p, D)),       # wo^T (padded rows)
                const_spec((1, D)),             # bo
                const_spec((D, Mh)),            # w1^T
                const_spec((1, Mh)),            # b1
                const_spec((Mh, D)),            # w2^T
                const_spec((1, D)),             # b2
            ],
            out_specs=pl.BlockSpec((1, tile_n1, D), lambda b, t: (b, t, 0)),
            scratch_shapes=[
                pltpu.VMEM((N2, inner_p), jnp.bfloat16),        # K cache (per batch)
                pltpu.VMEM((N2, inner_p), jnp.bfloat16),        # V cache (per batch)
                pltpu.VMEM((tile_n1, inner_p), jnp.bfloat16),   # q buffer
                pltpu.VMEM((tile_n1, inner_p), jnp.bfloat16),   # per-head attn out
            ]),
        compiler_params=pltpu.CompilerParams(
            # Tile axis MUST be "arbitrary" (sequential) so the per-batch K/V
            # cache written at t == 0 is valid for later tiles on the same core.
            dimension_semantics=("parallel", "arbitrary"),
            vmem_limit_bytes=vmem_limit),
    )
    return jax.jit(call)


def prepare_params(raw, *, num_heads, dim_head):
    """Host-side weight prep: transpose, fold softmax scale into wq/bq,
    zero-pad dim_head to a lane tile (exact: padded cols/rows are zero), cast to bf16."""
    inner = num_heads * dim_head
    dh_p = _round_up(dim_head, 128)
    inner_p = num_heads * dh_p
    scale = dim_head ** -0.5
    bf16 = jnp.bfloat16
    f32 = jnp.float32

    def pad_head_cols(w_t):  # (K, inner) -> (K, inner_p), zero pad per head
        K = w_t.shape[0]
        w = w_t.reshape(K, num_heads, dim_head)
        w = jnp.pad(w, ((0, 0), (0, 0), (0, dh_p - dim_head)))
        return w.reshape(K, inner_p)

    def pad_head_rows(w):    # (inner, D) -> (inner_p, D), zero pad per head
        D = w.shape[1]
        w = w.reshape(num_heads, dim_head, D)
        w = jnp.pad(w, ((0, 0), (0, dh_p - dim_head), (0, 0)))
        return w.reshape(inner_p, D)

    def pad_head_bias(b):    # (1, inner) -> (1, inner_p)
        b = b.reshape(num_heads, dim_head)
        b = jnp.pad(b, ((0, 0), (0, dh_p - dim_head)))
        return b.reshape(1, inner_p)

    wk_raw = raw["wkv"][:inner]      # (inner, Dc)
    wv_raw = raw["wkv"][inner:]

    return {
        "cw": raw["cw"].astype(f32),
        "cb": raw["cb"].astype(f32),
        "wq_t": pad_head_cols((raw["wq"] * scale).T).astype(bf16),   # (D,  inner_p)
        "bq": (pad_head_bias(raw["bq"]) * scale).astype(f32),
        "wk_t": pad_head_cols(wk_raw.T).astype(bf16),                # (Dc, inner_p)
        "bk": pad_head_bias(raw["bkv"][:, :inner]).astype(f32),
        "wv_t": pad_head_cols(wv_raw.T).astype(bf16),                # (Dc, inner_p)
        "bv": pad_head_bias(raw["bkv"][:, inner:]).astype(f32),
        "wo_t": pad_head_rows(raw["wo"].T).astype(bf16),             # (inner_p, D)
        "bo": raw["bo"].astype(f32),
        "w1_t": raw["w1"].T.astype(bf16),                            # (D, Mh)
        "b1": raw["b1"].astype(f32),
        "w2_t": raw["w2"].T.astype(bf16),                            # (Mh, D)
        "b2": raw["b2"].astype(f32),
        "_dh_p": int(dh_p),
        "_inner_p": int(inner_p),
    }


def cross_attn_block(x, context, prepared, *, num_heads, dim_head):
    """x: (B, N1, D) f32, context: (B, N2, Dc) f32 -> (B, N1, D) f32."""
    B, N1, D = x.shape
    Bc, N2, Dc = context.shape
    assert Bc == B
    # norm_context is LayerNorm(hidden_size) in the PyTorch module.
    assert Dc == D, "CrossAttnBlock requires context_dim == hidden_size (norm_context)"

    dh_p = int(prepared["_dh_p"])
    inner_p = int(prepared["_inner_p"])
    Mh = int(prepared["w1_t"].shape[1])

    vmem_limit = _vmem_limit_bytes()
    max_tile = 512 if vmem_limit >= 96 * 1024 * 1024 else 256
    tile_n1 = _pick_tile_n1(N1, max_tile)
    N1p = _round_up(N1, tile_n1)

    # Zero-pad N1 so every tile is full; padded rows are row-local and sliced off.
    x_in = x if N1p == N1 else jnp.pad(x, ((0, 0), (0, N1p - N1), (0, 0)))

    call = _build_call(B=B, N1=N1p, N2=N2, D=D, Dc=Dc, inner_p=inner_p, Mh=Mh,
                       tile_n1=tile_n1, num_heads=num_heads, dh_p=dh_p,
                       single_buffer=_supports_single_buffered_inputs(),
                       vmem_limit=vmem_limit)

    out = call(x_in, context,
               prepared["cw"], prepared["cb"],
               prepared["wq_t"], prepared["bq"],
               prepared["wk_t"], prepared["bk"],
               prepared["wv_t"], prepared["bv"],
               prepared["wo_t"], prepared["bo"],
               prepared["w1_t"], prepared["b1"],
               prepared["w2_t"], prepared["b2"])
    if N1p != N1:
        out = out[:, :N1, :]
    return out


def _reference(x, context, params, *, num_heads, dim_head):
    """Pure-JAX f32 reference mirroring the PyTorch forward."""
    inner = num_heads * dim_head
    B, N1, D = x.shape

    x1 = _layernorm(x, 1e-6)
    c1 = _layernorm(context, 1e-5) * params["cw"][0] + params["cb"][0]

    q = jnp.einsum("bnd,id->bni", x1, params["wq"]) + params["bq"][0]
    kv = jnp.einsum("bnd,id->bni", c1, params["wkv"]) + params["bkv"][0]
    k, v = kv[..., :inner], kv[..., inner:]

    def split_heads(t):
        return t.reshape(B, t.shape[1], num_heads, dim_head).transpose(0, 2, 1, 3)

    qh, kh, vh = map(split_heads, (q, k, v))
    s = jnp.einsum("bhqd,bhkd->bhqk", qh, kh) / math.sqrt(dim_head)
    p = jax.nn.softmax(s, axis=-1)
    o = jnp.einsum("bhqk,bhkd->bhqd", p, vh)
    o = o.transpose(0, 2, 1, 3).reshape(B, N1, inner)
    attn_out = jnp.einsum("bni,di->bnd", o, params["wo"]) + params["bo"][0]
    x = x + attn_out

    x2 = _layernorm(x, 1e-6)
    h1 = _gelu_tanh(jnp.einsum("bnd,md->bnm", x2, params["w1"]) + params["b1"][0])
    h2 = jnp.einsum("bnm,dm->bnd", h1, params["w2"]) + params["b2"][0]
    return x + h2


if __name__ == "__main__":
    # Small shapes consistent with the module.
    B, N1, N2 = 2, 16, 8
    hidden_size = 32
    context_dim = 32           # must equal hidden_size (norm_context = LayerNorm(hidden_size))
    num_heads = 1              # CrossAttnBlock default
    dim_head = 48              # Attention default
    mlp_ratio = 4.0
    inner = num_heads * dim_head
    mlp_hidden = int(hidden_size * mlp_ratio)

    key = jax.random.PRNGKey(0)
    ks = jax.random.split(key, 16)

    def init(k, shape, scale=0.05):
        return (scale * jax.random.normal(k, shape)).astype(jnp.float32)

    raw_params = {
        "cw": jnp.ones((1, context_dim), jnp.float32),       # LayerNorm affine init
        "cb": jnp.zeros((1, context_dim), jnp.float32),
        "wq": init(ks[0], (inner, hidden_size)),
        "bq": init(ks[1], (1, inner)),
        "wkv": init(ks[2], (2 * inner, context_dim)),
        "bkv": init(ks[3], (1, 2 * inner)),
        "wo": init(ks[4], (hidden_size, inner)),
        "bo": init(ks[5], (1, hidden_size)),
        "w1": init(ks[6], (mlp_hidden, hidden_size)),
        "b1": init(ks[7], (1, mlp_hidden)),
        "w2": init(ks[8], (hidden_size, mlp_hidden)),
        "b2": init(ks[9], (1, hidden_size)),
    }

    x = jax.random.normal(ks[10], (B, N1, hidden_size), jnp.float32)
    context = jax.random.normal(ks[11], (B, N2, context_dim), jnp.float32)

    prepared = prepare_params(raw_params, num_heads=num_heads, dim_head=dim_head)
    out = cross_attn_block(x, context, prepared, num_heads=num_heads, dim_head=dim_head)
    out = jax.block_until_ready(out)

    ref = _reference(x, context, raw_params, num_heads=num_heads, dim_head=dim_head)
    # bf16 MXU inputs (f32 accumulation) + approx softmax reciprocal -> compare
    # against the f32 reference with a correspondingly relaxed tolerance.
    if not bool(jnp.allclose(out, ref, rtol=2e-2, atol=2e-2)):
        max_err = float(jnp.max(jnp.abs(out - ref)))
        raise AssertionError(f"Pallas kernel output mismatch vs JAX reference (max|diff|={max_err})")

    print("KERNEL_OK")
</pallas_src>

<mosaic_0001>
module attributes {stable_mosaic.version = 11 : i64} {
  func.func @_cross_attn_block_kernel(%arg0: i32, %arg1: i32, %arg2: memref<1x16x32xf32, #tpu.memory_space<vmem>>, %arg3: memref<1x8x32xf32, #tpu.memory_space<vmem>>, %arg4: memref<1x32xf32, #tpu.memory_space<vmem>>, %arg5: memref<1x32xf32, #tpu.memory_space<vmem>>, %arg6: memref<32x128xbf16, #tpu.memory_space<vmem>>, %arg7: memref<1x128xf32, #tpu.memory_space<vmem>>, %arg8: memref<32x128xbf16, #tpu.memory_space<vmem>>, %arg9: memref<1x128xf32, #tpu.memory_space<vmem>>, %arg10: memref<32x128xbf16, #tpu.memory_space<vmem>>, %arg11: memref<1x128xf32, #tpu.memory_space<vmem>>, %arg12: memref<128x32xbf16, #tpu.memory_space<vmem>>, %arg13: memref<1x32xf32, #tpu.memory_space<vmem>>, %arg14: memref<32x128xbf16, #tpu.memory_space<vmem>>, %arg15: memref<1x128xf32, #tpu.memory_space<vmem>>, %arg16: memref<128x32xbf16, #tpu.memory_space<vmem>>, %arg17: memref<1x32xf32, #tpu.memory_space<vmem>>, %arg18: memref<1x16x32xf32, #tpu.memory_space<vmem>>, %arg19: memref<8x128xbf16, #tpu.memory_space<vmem>>, %arg20: memref<8x128xbf16, #tpu.memory_space<vmem>>, %arg21: memref<16x128xbf16, #tpu.memory_space<vmem>>, %arg22: memref<16x128xbf16, #tpu.memory_space<vmem>>) attributes {dimension_semantics = [#tpu.dimension_semantics<parallel>, #tpu.dimension_semantics<arbitrary>], iteration_bounds = array<i64: 2, 1>, scalar_prefetch = 0 : i64, scratch_operands = 4 : i64, tpu.core_type = #tpu.core_type<tc>, window_params = [{transform_indices = @transform_0, window_bounds = array<i64: 1, 16, 32>}, {transform_indices = @transform_1, window_bounds = array<i64: 1, 8, 32>}, {pipeline_mode = #tpu.pipeline_mode<synchronous>, transform_indices = @transform_2, window_bounds = array<i64: 1, 32>}, {pipeline_mode = #tpu.pipeline_mode<synchronous>, transform_indices = @transform_3, window_bounds = array<i64: 1, 32>}, {pipeline_mode = #tpu.pipeline_mode<synchronous>, transform_indices = @transform_4, window_bounds = array<i64: 32, 128>}, {pipeline_mode = #tpu.pipeline_mode<synchronous>, transform_indices = @transform_5, window_bounds = array<i64: 1, 128>}, {pipeline_mode = #tpu.pipeline_mode<synchronous>, transform_indices = @transform_6, window_bounds = array<i64: 32, 128>}, {pipeline_mode = #tpu.pipeline_mode<synchronous>, transform_indices = @transform_7, window_bounds = array<i64: 1, 128>}, {pipeline_mode = #tpu.pipeline_mode<synchronous>, transform_indices = @transform_8, window_bounds = array<i64: 32, 128>}, {pipeline_mode = #tpu.pipeline_mode<synchronous>, transform_indices = @transform_9, window_bounds = array<i64: 1, 128>}, {pipeline_mode = #tpu.pipeline_mode<synchronous>, transform_indices = @transform_10, window_bounds = array<i64: 128, 32>}, {pipeline_mode = #tpu.pipeline_mode<synchronous>, transform_indices = @transform_11, window_bounds = array<i64: 1, 32>}, {pipeline_mode = #tpu.pipeline_mode<synchronous>, transform_indices = @transform_12, window_bounds = array<i64: 32, 128>}, {pipeline_mode = #tpu.pipeline_mode<synchronous>, transform_indices = @transform_13, window_bounds = array<i64: 1, 128>}, {pipeline_mode = #tpu.pipeline_mode<synchronous>, transform_indices = @transform_14, window_bounds = array<i64: 128, 32>}, {pipeline_mode = #tpu.pipeline_mode<synchronous>, transform_indices = @transform_15, window_bounds = array<i64: 1, 32>}, {transform_indices = @transform_16, window_bounds = array<i64: 1, 16, 32>}]} {
    %c0_i32 = arith.constant 0 : i32
    %0 = arith.cmpi eq, %arg1, %c0_i32 : i32
    %1 = arith.extui %0 : i1 to i32
    %c0_i32_0 = arith.constant 0 : i32
    %2 = arith.cmpi ne, %1, %c0_i32_0 : i32
    scf.if %2 {
      %c0_55 = arith.constant 0 : index
      %c0_56 = arith.constant 0 : index
      %c0_57 = arith.constant 0 : index
      %111 = vector.load %arg3[%c0_55, %c0_56, %c0_57] : memref<1x8x32xf32, #tpu.memory_space<vmem>>, vector<1x8x32xf32>
      %112 = vector.shape_cast %111 : vector<1x8x32xf32> to vector<8x32xf32>
      %cst_58 = arith.constant dense<0.000000e+00> : vector<8xf32>
      %113 = vector.multi_reduction <add>, %112, %cst_58 [1] : vector<8x32xf32> to vector<8xf32>
      %114 = vector.shape_cast %113 : vector<8xf32> to vector<8x1xf32>
      %cst_59 = arith.constant 3.200000e+01 : f32
      %115 = vector.broadcast %cst_59 : f32 to vector<8x1xf32>
      %116 = arith.divf %114, %115 : vector<8x1xf32>
      %117 = vector.broadcast %116 : vector<8x1xf32> to vector<8x32xf32>
      %118 = arith.subf %112, %117 : vector<8x32xf32>
      %119 = arith.mulf %118, %118 : vector<8x32xf32>
      %cst_60 = arith.constant dense<0.000000e+00> : vector<8xf32>
      %120 = vector.multi_reduction <add>, %119, %cst_60 [1] : vector<8x32xf32> to vector<8xf32>
      %121 = vector.shape_cast %120 : vector<8xf32> to vector<8x1xf32>
      %cst_61 = arith.constant 3.200000e+01 : f32
      %122 = vector.broadcast %cst_61 : f32 to vector<8x1xf32>
      %123 = arith.divf %121, %122 : vector<8x1xf32>
      %124 = vector.broadcast %116 : vector<8x1xf32> to vector<8x32xf32>
      %125 = arith.subf %112, %124 : vector<8x32xf32>
      %cst_62 = arith.constant 9.99999974E-6 : f32
      %126 = vector.broadcast %cst_62 : f32 to vector<8x1xf32>
      %127 = arith.addf %123, %126 : vector<8x1xf32>
      %128 = math.rsqrt %127 : vector<8x1xf32>
      %129 = vector.broadcast %128 : vector<8x1xf32> to vector<8x32xf32>
      %130 = arith.mulf %125, %129 : vector<8x32xf32>
      %c0_63 = arith.constant 0 : index
      %c0_64 = arith.constant 0 : index
      %131 = vector.load %arg4[%c0_63, %c0_64] : memref<1x32xf32, #tpu.memory_space<vmem>>, vector<1x32xf32>
      %132 = vector.shape_cast %131 : vector<1x32xf32> to vector<32xf32>
      %133 = vector.shape_cast %132 : vector<32xf32> to vector<1x32xf32>
      %134 = vector.broadcast %133 : vector<1x32xf32> to vector<8x32xf32>
      %135 = arith.mulf %130, %134 : vector<8x32xf32>
      %c0_65 = arith.constant 0 : index
      %c0_66 = arith.constant 0 : index
      %136 = vector.load %arg5[%c0_65, %c0_66] : memref<1x32xf32, #tpu.memory_space<vmem>>, vector<1x32xf32>
      %137 = vector.shape_cast %136 : vector<1x32xf32> to vector<32xf32>
      %138 = vector.shape_cast %137 : vector<32xf32> to vector<1x32xf32>
      %139 = vector.broadcast %138 : vector<1x32xf32> to vector<8x32xf32>
      %140 = arith.addf %135, %139 : vector<8x32xf32>
      %141 = arith.truncf %140 : vector<8x32xf32> to vector<8x32xbf16>
      %c0_67 = arith.constant 0 : index
      %c0_68 = arith.constant 0 : index
      %142 = vector.load %arg8[%c0_67, %c0_68] : memref<32x128xbf16, #tpu.memory_space<vmem>>, vector<32x128xbf16>
      %cst_69 = arith.constant dense<0.000000e+00> : vector<8x128xf32>
      %143 = tpu.matmul %141, %142, %cst_69 {dimension_numbers = #tpu.dot_dimension_numbers<[1], [0], [0], [1], [0, 0, 1, 1], [], []>} : vector<8x32xbf16>, vector<32x128xbf16>, vector<8x128xf32> -> vector<8x128xf32>
      %c0_70 = arith.constant 0 : index
      %c0_71 = arith.constant 0 : index
      %144 = vector.load %arg9[%c0_70, %c0_71] : memref<1x128xf32, #tpu.memory_space<vmem>>, vector<1x128xf32>
      %145 = vector.shape_cast %144 : vector<1x128xf32> to vector<128xf32>
      %146 = vector.shape_cast %145 : vector<128xf32> to vector<1x128xf32>
      %147 = vector.broadcast %146 : vector<1x128xf32> to vector<8x128xf32>
      %148 = arith.addf %143, %147 : vector<8x128xf32>
      %c0_72 = arith.constant 0 : index
      %c0_73 = arith.constant 0 : index
      %149 = vector.load %arg10[%c0_72, %c0_73] : memref<32x128xbf16, #tpu.memory_space<vmem>>, vector<32x128xbf16>
      %cst_74 = arith.constant dense<0.000000e+00> : vector<8x128xf32>
      %150 = tpu.matmul %141, %149, %cst_74 {dimension_numbers = #tpu.dot_dimension_numbers<[1], [0], [0], [1], [0, 0, 1, 1], [], []>} : vector<8x32xbf16>, vector<32x128xbf16>, vector<8x128xf32> -> vector<8x128xf32>
      %c0_75 = arith.constant 0 : index
      %c0_76 = arith.constant 0 : index
      %151 = vector.load %arg11[%c0_75, %c0_76] : memref<1x128xf32, #tpu.memory_space<vmem>>, vector<1x128xf32>
      %152 = vector.shape_cast %151 : vector<1x128xf32> to vector<128xf32>
      %153 = vector.shape_cast %152 : vector<128xf32> to vector<1x128xf32>
      %154 = vector.broadcast %153 : vector<1x128xf32> to vector<8x128xf32>
      %155 = arith.addf %150, %154 : vector<8x128xf32>
      %156 = arith.truncf %148 : vector<8x128xf32> to vector<8x128xbf16>
      %c0_77 = arith.constant 0 : index
      %c0_78 = arith.constant 0 : index
      %157 = vector.load %arg19[%c0_77, %c0_78] : memref<8x128xbf16, #tpu.memory_space<vmem>>, vector<8x128xbf16>
      tpu.vector_store %arg19[%c0_77, %c0_78], %156 {strides = array<i32>} : memref<8x128xbf16, #tpu.memory_space<vmem>>, vector<8x128xbf16>,
      %158 = arith.truncf %155 : vector<8x128xf32> to vector<8x128xbf16>
      %c0_79 = arith.constant 0 : index
      %c0_80 = arith.constant 0 : index
      %159 = vector.load %arg20[%c0_79, %c0_80] : memref<8x128xbf16, #tpu.memory_space<vmem>>, vector<8x128xbf16>
      tpu.vector_store %arg20[%c0_79, %c0_80], %158 {strides = array<i32>} : memref<8x128xbf16, #tpu.memory_space<vmem>>, vector<8x128xbf16>,
    } else {
    }
    %c0 = arith.constant 0 : index
    %c0_1 = arith.constant 0 : index
    %c0_2 = arith.constant 0 : index
    %3 = vector.load %arg2[%c0, %c0_1, %c0_2] : memref<1x16x32xf32, #tpu.memory_space<vmem>>, vector<1x16x32xf32>
    %4 = vector.shape_cast %3 : vector<1x16x32xf32> to vector<16x32xf32>
    %cst = arith.constant dense<0.000000e+00> : vector<16xf32>
    %5 = vector.multi_reduction <add>, %4, %cst [1] : vector<16x32xf32> to vector<16xf32>
    %6 = vector.shape_cast %5 : vector<16xf32> to vector<16x1xf32>
    %cst_3 = arith.constant 3.200000e+01 : f32
    %7 = vector.broadcast %cst_3 : f32 to vector<16x1xf32>
    %8 = arith.divf %6, %7 : vector<16x1xf32>
    %9 = vector.broadcast %8 : vector<16x1xf32> to vector<16x32xf32>
    %10 = arith.subf %4, %9 : vector<16x32xf32>
    %11 = arith.mulf %10, %10 : vector<16x32xf32>
    %cst_4 = arith.constant dense<0.000000e+00> : vector<16xf32>
    %12 = vector.multi_reduction <add>, %11, %cst_4 [1] : vector<16x32xf32> to vector<16xf32>
    %13 = vector.shape_cast %12 : vector<16xf32> to vector<16x1xf32>
    %cst_5 = arith.constant 3.200000e+01 : f32
    %14 = vector.broadcast %cst_5 : f32 to vector<16x1xf32>
    %15 = arith.divf %13, %14 : vector<16x1xf32>
    %16 = vector.broadcast %8 : vector<16x1xf32> to vector<16x32xf32>
    %17 = arith.subf %4, %16 : vector<16x32xf32>
    %cst_6 = arith.constant 9.99999997E-7 : f32
    %18 = vector.broadcast %cst_6 : f32 to vector<16x1xf32>
    %19 = arith.addf %15, %18 : vector<16x1xf32>
    %20 = math.rsqrt %19 : vector<16x1xf32>
    %21 = vector.broadcast %20 : vector<16x1xf32> to vector<16x32xf32>
    %22 = arith.mulf %17, %21 : vector<16x32xf32>
    %23 = arith.truncf %22 : vector<16x32xf32> to vector<16x32xbf16>
    %c0_7 = arith.constant 0 : index
    %c0_8 = arith.constant 0 : index
    %24 = vector.load %arg6[%c0_7, %c0_8] : memref<32x128xbf16, #tpu.memory_space<vmem>>, vector<32x128xbf16>
    %cst_9 = arith.constant dense<0.000000e+00> : vector<16x128xf32>
    %25 = tpu.matmul %23, %24, %cst_9 {dimension_numbers = #tpu.dot_dimension_numbers<[1], [0], [0], [1], [0, 0, 1, 1], [], []>} : vector<16x32xbf16>, vector<32x128xbf16>, vector<16x128xf32> -> vector<16x128xf32>
    %c0_10 = arith.constant 0 : index
    %c0_11 = arith.constant 0 : index
    %26 = vector.load %arg7[%c0_10, %c0_11] : memref<1x128xf32, #tpu.memory_space<vmem>>, vector<1x128xf32>
    %27 = vector.shape_cast %26 : vector<1x128xf32> to vector<128xf32>
    %28 = vector.shape_cast %27 : vector<128xf32> to vector<1x128xf32>
    %29 = vector.broadcast %28 : vector<1x128xf32> to vector<16x128xf32>
    %30 = arith.addf %25, %29 : vector<16x128xf32>
    %31 = arith.truncf %30 : vector<16x128xf32> to vector<16x128xbf16>
    %c0_12 = arith.constant 0 : index
    %c0_13 = arith.constant 0 : index
    %32 = vector.load %arg21[%c0_12, %c0_13] : memref<16x128xbf16, #tpu.memory_space<vmem>>, vector<16x128xbf16>
    tpu.vector_store %arg21[%c0_12, %c0_13], %31 {strides = array<i32>} : memref<16x128xbf16, #tpu.memory_space<vmem>>, vector<16x128xbf16>,
    %c0_14 = arith.constant 0 : index
    %c0_15 = arith.constant 0 : index
    %33 = vector.load %arg21[%c0_14, %c0_15] : memref<16x128xbf16, #tpu.memory_space<vmem>>, vector<16x128xbf16>
    %c0_16 = arith.constant 0 : index
    %c0_17 = arith.constant 0 : index
    %34 = vector.load %arg19[%c0_16, %c0_17] : memref<8x128xbf16, #tpu.memory_space<vmem>>, vector<8x128xbf16>
    %c0_18 = arith.constant 0 : index
    %c0_19 = arith.constant 0 : index
    %35 = vector.load %arg20[%c0_18, %c0_19] : memref<8x128xbf16, #tpu.memory_space<vmem>>, vector<8x128xbf16>
    %cst_20 = arith.constant dense<0.000000e+00> : vector<16x8xf32>
    %36 = tpu.matmul %33, %34, %cst_20 {dimension_numbers = #tpu.dot_dimension_numbers<[1], [1], [0], [0], [0, 0, 1, 0], [], []>} : vector<16x128xbf16>, vector<8x128xbf16>, vector<16x8xf32> -> vector<16x8xf32>
    %cst_21 = arith.constant dense<0xFF800000> : vector<16xf32>
    %37 = vector.multi_reduction <maximumf>, %36, %cst_21 [1] : vector<16x8xf32> to vector<16xf32>
    %38 = vector.shape_cast %37 : vector<16xf32> to vector<16x1xf32>
    %39 = vector.broadcast %38 : vector<16x1xf32> to vector<16x8xf32>
    %40 = arith.subf %36, %39 : vector<16x8xf32>
    %41 = math.exp %40 : vector<16x8xf32>
    %cst_22 = arith.constant dense<0.000000e+00> : vector<16xf32>
    %42 = vector.multi_reduction <add>, %41, %cst_22 [1] : vector<16x8xf32> to vector<16xf32>
    %43 = vector.shape_cast %42 : vector<16xf32> to vector<16x1xf32>
    %44 = tpu.reciprocal %43 {approx = true} : vector<16x1xf32> -> vector<16x1xf32>
    %45 = vector.broadcast %44 : vector<16x1xf32> to vector<16x8xf32>
    %46 = arith.mulf %41, %45 : vector<16x8xf32>
    %47 = arith.truncf %46 : vector<16x8xf32> to vector<16x8xbf16>
    %cst_23 = arith.constant dense<0.000000e+00> : vector<16x128xf32>
    %48 = tpu.matmul %47, %35, %cst_23 {dimension_numbers = #tpu.dot_dimension_numbers<[1], [0], [0], [1], [0, 0, 1, 1], [], []>} : vector<16x8xbf16>, vector<8x128xbf16>, vector<16x128xf32> -> vector<16x128xf32>
    %49 = arith.truncf %48 : vector<16x128xf32> to vector<16x128xbf16>
    %c0_24 = arith.constant 0 : index
    %c0_25 = arith.constant 0 : index
    %50 = vector.load %arg22[%c0_24, %c0_25] : memref<16x128xbf16, #tpu.memory_space<vmem>>, vector<16x128xbf16>
    tpu.vector_store %arg22[%c0_24, %c0_25], %49 {strides = array<i32>} : memref<16x128xbf16, #tpu.memory_space<vmem>>, vector<16x128xbf16>,
    %c0_26 = arith.constant 0 : index
    %c0_27 = arith.constant 0 : index
    %51 = vector.load %arg22[%c0_26, %c0_27] : memref<16x128xbf16, #tpu.memory_space<vmem>>, vector<16x128xbf16>
    %c0_28 = arith.constant 0 : index
    %c0_29 = arith.constant 0 : index
    %52 = vector.load %arg12[%c0_28, %c0_29] : memref<128x32xbf16, #tpu.memory_space<vmem>>, vector<128x32xbf16>
    %cst_30 = arith.constant dense<0.000000e+00> : vector<16x32xf32>
    %53 = tpu.matmul %51, %52, %cst_30 {dimension_numbers = #tpu.dot_dimension_numbers<[1], [0], [0], [1], [0, 0, 1, 1], [], []>} : vector<16x128xbf16>, vector<128x32xbf16>, vector<16x32xf32> -> vector<16x32xf32>
    %c0_31 = arith.constant 0 : index
    %c0_32 = arith.constant 0 : index
    %54 = vector.load %arg13[%c0_31, %c0_32] : memref<1x32xf32, #tpu.memory_space<vmem>>, vector<1x32xf32>
    %55 = vector.shape_cast %54 : vector<1x32xf32> to vector<32xf32>
    %56 = vector.shape_cast %55 : vector<32xf32> to vector<1x32xf32>
    %57 = vector.broadcast %56 : vector<1x32xf32> to vector<16x32xf32>
    %58 = arith.addf %53, %57 : vector<16x32xf32>
    %59 = arith.addf %4, %58 : vector<16x32xf32>
    %cst_33 = arith.constant dense<0.000000e+00> : vector<16xf32>
    %60 = vector.multi_reduction <add>, %59, %cst_33 [1] : vector<16x32xf32> to vector<16xf32>
    %61 = vector.shape_cast %60 : vector<16xf32> to vector<16x1xf32>
    %cst_34 = arith.constant 3.200000e+01 : f32
    %62 = vector.broadcast %cst_34 : f32 to vector<16x1xf32>
    %63 = arith.divf %61, %62 : vector<16x1xf32>
    %64 = vector.broadcast %63 : vector<16x1xf32> to vector<16x32xf32>
    %65 = arith.subf %59, %64 : vector<16x32xf32>
    %66 = arith.mulf %65, %65 : vector<16x32xf32>
    %cst_35 = arith.constant dense<0.000000e+00> : vector<16xf32>
    %67 = vector.multi_reduction <add>, %66, %cst_35 [1] : vector<16x32xf32> to vector<16xf32>
    %68 = vector.shape_cast %67 : vector<16xf32> to vector<16x1xf32>
    %cst_36 = arith.constant 3.200000e+01 : f32
    %69 = vector.broadcast %cst_36 : f32 to vector<16x1xf32>
    %70 = arith.divf %68, %69 : vector<16x1xf32>
    %71 = vector.broadcast %63 : vector<16x1xf32> to vector<16x32xf32>
    %72 = arith.subf %59, %71 : vector<16x32xf32>
    %cst_37 = arith.constant 9.99999997E-7 : f32
    %73 = vector.broadcast %cst_37 : f32 to vector<16x1xf32>
    %74 = arith.addf %70, %73 : vector<16x1xf32>
    %75 = math.rsqrt %74 : vector<16x1xf32>
    %76 = vector.broadcast %75 : vector<16x1xf32> to vector<16x32xf32>
    %77 = arith.mulf %72, %76 : vector<16x32xf32>
    %78 = arith.truncf %77 : vector<16x32xf32> to vector<16x32xbf16>
    %c0_38 = arith.constant 0 : index
    %c0_39 = arith.constant 0 : index
    %79 = vector.load %arg14[%c0_38, %c0_39] : memref<32x128xbf16, #tpu.memory_space<vmem>>, vector<32x128xbf16>
    %cst_40 = arith.constant dense<0.000000e+00> : vector<16x128xf32>
    %80 = tpu.matmul %78, %79, %cst_40 {dimension_numbers = #tpu.dot_dimension_numbers<[1], [0], [0], [1], [0, 0, 1, 1], [], []>} : vector<16x32xbf16>, vector<32x128xbf16>, vector<16x128xf32> -> vector<16x128xf32>
    %c0_41 = arith.constant 0 : index
    %c0_42 = arith.constant 0 : index
    %81 = vector.load %arg15[%c0_41, %c0_42] : memref<1x128xf32, #tpu.memory_space<vmem>>, vector<1x128xf32>
    %82 = vector.shape_cast %81 : vector<1x128xf32> to vector<128xf32>
    %83 = vector.shape_cast %82 : vector<128xf32> to vector<1x128xf32>
    %84 = vector.broadcast %83 : vector<1x128xf32> to vector<16x128xf32>
    %85 = arith.addf %80, %84 : vector<16x128xf32>
    %cst_43 = arith.constant 5.000000e-01 : f32
    %86 = vector.broadcast %cst_43 : f32 to vector<16x128xf32>
    %87 = arith.mulf %86, %85 : vector<16x128xf32>
    %cst_44 = arith.constant 4.471500e-02 : f32
    %88 = vector.broadcast %cst_44 : f32 to vector<16x128xf32>
    %89 = arith.mulf %88, %85 : vector<16x128xf32>
    %90 = arith.mulf %89, %85 : vector<16x128xf32>
    %91 = arith.mulf %90, %85 : vector<16x128xf32>
    %92 = arith.addf %85, %91 : vector<16x128xf32>
    %cst_45 = arith.constant 0.797884583 : f32
    %93 = vector.broadcast %cst_45 : f32 to vector<16x128xf32>
    %94 = arith.mulf %93, %92 : vector<16x128xf32>
    %95 = math.tanh %94 : vector<16x128xf32>
    %cst_46 = arith.constant 1.000000e+00 : f32
    %96 = vector.broadcast %cst_46 : f32 to vector<16x128xf32>
    %97 = arith.addf %96, %95 : vector<16x128xf32>
    %98 = arith.mulf %87, %97 : vector<16x128xf32>
    %99 = arith.truncf %98 : vector<16x128xf32> to vector<16x128xbf16>
    %c0_47 = arith.constant 0 : index
    %c0_48 = arith.constant 0 : index
    %100 = vector.load %arg16[%c0_47, %c0_48] : memref<128x32xbf16, #tpu.memory_space<vmem>>, vector<128x32xbf16>
    %cst_49 = arith.constant dense<0.000000e+00> : vector<16x32xf32>
    %101 = tpu.matmul %99, %100, %cst_49 {dimension_numbers = #tpu.dot_dimension_numbers<[1], [0], [0], [1], [0, 0, 1, 1], [], []>} : vector<16x128xbf16>, vector<128x32xbf16>, vector<16x32xf32> -> vector<16x32xf32>
    %c0_50 = arith.constant 0 : index
    %c0_51 = arith.constant 0 : index
    %102 = vector.load %arg17[%c0_50, %c0_51] : memref<1x32xf32, #tpu.memory_space<vmem>>, vector<1x32xf32>
    %103 = vector.shape_cast %102 : vector<1x32xf32> to vector<32xf32>
    %104 = vector.shape_cast %103 : vector<32xf32> to vector<1x32xf32>
    %105 = vector.broadcast %104 : vector<1x32xf32> to vector<16x32xf32>
    %106 = arith.addf %101, %105 : vector<16x32xf32>
    %107 = arith.addf %59, %106 : vector<16x32xf32>
    %c0_52 = arith.constant 0 : index
    %c0_53 = arith.constant 0 : index
    %c0_54 = arith.constant 0 : index
    %108 = vector.load %arg18[%c0_52, %c0_53, %c0_54] : memref<1x16x32xf32, #tpu.memory_space<vmem>>, vector<1x16x32xf32>
    %109 = vector.shape_cast %108 : vector<1x16x32xf32> to vector<16x32xf32>
    %110 = vector.shape_cast %107 : vector<16x32xf32> to vector<1x16x32xf32>
    tpu.vector_store %arg18[%c0_52, %c0_53, %c0_54], %110 {strides = array<i32>} : memref<1x16x32xf32, #tpu.memory_space<vmem>>, vector<1x16x32xf32>,
    return
  }
  func.func @transform_0(%arg0: i32, %arg1: i32) -> (i32, i32, i32) {
    %c0_i32 = arith.constant 0 : i32
    %c0_i32_0 = arith.constant 0 : i32
    return %arg0, %arg1, %c0_i32 : i32, i32, i32
  }
  func.func @transform_1(%arg0: i32, %arg1: i32) -> (i32, i32, i32) {
    %c0_i32 = arith.constant 0 : i32
    %c0_i32_0 = arith.constant 0 : i32
    %c0_i32_1 = arith.constant 0 : i32
    return %arg0, %c0_i32, %c0_i32_0 : i32, i32, i32
  }
  func.func @transform_2(%arg0: i32, %arg1: i32) -> (i32, i32) {
    %c0_i32 = arith.constant 0 : i32
    %c0_i32_0 = arith.constant 0 : i32
    %c0_i32_1 = arith.constant 0 : i32
    return %c0_i32, %c0_i32_0 : i32, i32
  }
  func.func @transform_3(%arg0: i32, %arg1: i32) -> (i32, i32) {
    %c0_i32 = arith.constant 0 : i32
    %c0_i32_0 = arith.constant 0 : i32
    %c0_i32_1 = arith.constant 0 : i32
    return %c0_i32, %c0_i32_0 : i32, i32
  }
  func.func @transform_4(%arg0: i32, %arg1: i32) -> (i32, i32) {
    %c0_i32 = arith.constant 0 : i32
    %c0_i32_0 = arith.constant 0 : i32
    %c0_i32_1 = arith.constant 0 : i32
    return %c0_i32, %c0_i32_0 : i32, i32
  }
  func.func @transform_5(%arg0: i32, %arg1: i32) -> (i32, i32) {
    %c0_i32 = arith.constant 0 : i32
    %c0_i32_0 = arith.constant 0 : i32
    %c0_i32_1 = arith.constant 0 : i32
    return %c0_i32, %c0_i32_0 : i32, i32
  }
  func.func @transform_6(%arg0: i32, %arg1: i32) -> (i32, i32) {
    %c0_i32 = arith.constant 0 : i32
    %c0_i32_0 = arith.constant 0 : i32
    %c0_i32_1 = arith.constant 0 : i32
    return %c0_i32, %c0_i32_0 : i32, i32
  }
  func.func @transform_7(%arg0: i32, %arg1: i32) -> (i32, i32) {
    %c0_i32 = arith.constant 0 : i32
    %c0_i32_0 = arith.constant 0 : i32
    %c0_i32_1 = arith.constant 0 : i32
    return %c0_i32, %c0_i32_0 : i32, i32
  }
  func.func @transform_8(%arg0: i32, %arg1: i32) -> (i32, i32) {
    %c0_i32 = arith.constant 0 : i32
    %c0_i32_0 = arith.constant 0 : i32
    %c0_i32_1 = arith.constant 0 : i32
    return %c0_i32, %c0_i32_0 : i32, i32
  }
  func.func @transform_9(%arg0: i32, %arg1: i32) -> (i32, i32) {
    %c0_i32 = arith.constant 0 : i32
    %c0_i32_0 = arith.constant 0 : i32
    %c0_i32_1 = arith.constant 0 : i32
    return %c0_i32, %c0_i32_0 : i32, i32
  }
  func.func @transform_10(%arg0: i32, %arg1: i32) -> (i32, i32) {
    %c0_i32 = arith.constant 0 : i32
    %c0_i32_0 = arith.constant 0 : i32
    %c0_i32_1 = arith.constant 0 : i32
    return %c0_i32, %c0_i32_0 : i32, i32
  }
  func.func @transform_11(%arg0: i32, %arg1: i32) -> (i32, i32) {
    %c0_i32 = arith.constant 0 : i32
    %c0_i32_0 = arith.constant 0 : i32
    %c0_i32_1 = arith.constant 0 : i32
    return %c0_i32, %c0_i32_0 : i32, i32
  }
  func.func @transform_12(%arg0: i32, %arg1: i32) -> (i32, i32) {
    %c0_i32 = arith.constant 0 : i32
    %c0_i32_0 = arith.constant 0 : i32
    %c0_i32_1 = arith.constant 0 : i32
    return %c0_i32, %c0_i32_0 : i32, i32
  }
  func.func @transform_13(%arg0: i32, %arg1: i32) -> (i32, i32) {
    %c0_i32 = arith.constant 0 : i32
    %c0_i32_0 = arith.constant 0 : i32
    %c0_i32_1 = arith.constant 0 : i32
    return %c0_i32, %c0_i32_0 : i32, i32
  }
  func.func @transform_14(%arg0: i32, %arg1: i32) -> (i32, i32) {
    %c0_i32 = arith.constant 0 : i32
    %c0_i32_0 = arith.constant 0 : i32
    %c0_i32_1 = arith.constant 0 : i32
    return %c0_i32, %c0_i32_0 : i32, i32
  }
  func.func @transform_15(%arg0: i32, %arg1: i32) -> (i32, i32) {
    %c0_i32 = arith.constant 0 : i32
    %c0_i32_0 = arith.constant 0 : i32
    %c0_i32_1 = arith.constant 0 : i32
    return %c0_i32, %c0_i32_0 : i32, i32
  }
  func.func @transform_16(%arg0: i32, %arg1: i32) -> (i32, i32, i32) {
    %c0_i32 = arith.constant 0 : i32
    %c0_i32_0 = arith.constant 0 : i32
    return %arg0, %arg1, %c0_i32 : i32, i32, i32
  }
}

</mosaic_0001>

<llo_original>
// kernel: tpu_custom_call.1
$region0: #{tpu_custom_call.1}
  #allocation0 [shape = 'u32[]', space=smem, size = 0x4, offset = 0x4, fixed_abs, tag = 'smem constant byte address 0x4 - core index']
  #allocation1 [shape = 'u32[144,128]{1,0:T(1,128)}', space=vmem, size = 0x12000, scoped, tag = 'internal scratch']
  #allocation2 [shape = 'bf16[8,128]{1,0:T(8,128)(2,1)}', space=vmem, size = 0x800, scoped, tag = 'scratch operand']
  #allocation3 [shape = 'bf16[8,128]{1,0:T(8,128)(2,1)}', space=vmem, size = 0x800, scoped, tag = 'scratch operand']
  #allocation4 [shape = 'bf16[16,128]{1,0:T(16,128)(2,1)}', space=vmem, size = 0x1000, scoped, tag = 'scratch operand']
  #allocation5 [shape = 'bf16[16,128]{1,0:T(16,128)(2,1)}', space=vmem, size = 0x1000, scoped, tag = 'scratch operand']
  %s0 = inlined_call_operand.vmem [shape: f32[2,16,32], index: 0, kind: input, shape index: {}]
  %s1 = inlined_call_operand.vmem [shape: f32[2,8,32], index: 1, kind: input, shape index: {}]
  %s2 = inlined_call_operand.vmem [shape: f32[1,32], index: 2, kind: input, shape index: {}]
  %s3 = inlined_call_operand.vmem [shape: f32[1,32], index: 3, kind: input, shape index: {}]
  %s4 = inlined_call_operand.vmem [shape: bf16[32,128], index: 4, kind: input, shape index: {}]
  %s5 = inlined_call_operand.vmem [shape: f32[1,128], index: 5, kind: input, shape index: {}]
  %s6 = inlined_call_operand.vmem [shape: bf16[32,128], index: 6, kind: input, shape index: {}]
  %s7 = inlined_call_operand.vmem [shape: f32[1,128], index: 7, kind: input, shape index: {}]
  %s8 = inlined_call_operand.vmem [shape: bf16[32,128], index: 8, kind: input, shape index: {}]
  %s9 = inlined_call_operand.vmem [shape: f32[1,128], index: 9, kind: input, shape index: {}]
  %s10 = inlined_call_operand.vmem [shape: bf16[128,32], index: 10, kind: input, shape index: {}]
  %s11 = inlined_call_operand.vmem [shape: f32[1,32], index: 11, kind: input, shape index: {}]
  %s12 = inlined_call_operand.vmem [shape: bf16[32,128], index: 12, kind: input, shape index: {}]
  %s13 = inlined_call_operand.vmem [shape: f32[1,128], index: 13, kind: input, shape index: {}]
  %s14 = inlined_call_operand.vmem [shape: bf16[128,32], index: 14, kind: input, shape index: {}]
  %s15 = inlined_call_operand.vmem [shape: f32[1,32], index: 15, kind: input, shape index: {}]
  %s16 = inlined_call_operand.hbm [shape: f32[2,16,32], index: 16, kind: output, shape index: {}]
  %s17 = sld [smem:[#allocation0]]
  $region101: #{tpu_custom_call.1} parent=0
    _
  %s19 = ssub.s32 1, %s17
  %s20 = scalar_select 0, %s19, %s17
  $region1: #{tpu_custom_call.1} parent=0
    #allocation6 [shape = 'u8[16384]{0}', space=vmem, size = 0x4000, scoped, tag = 'output window, operand 0']
    #allocation7 [shape = 's32[2]{0}', space=sflag, size = 0x8, scoped, tag = 'scoped memory for tpu_custom_call.1']
    %21 = vsyncpa [#allocation7], 0
    %s22 = scalar_lea.sflag [#allocation7], 1
    %23 = vsyncpa %s22, 0
    loop: start=0, step=1, limit=4
    $region2: #{tpu_custom_call.1} parent=1 // loop_pre_header
      _
    $region3: #{tpu_custom_call.1} parent=1 // loop_header
      %s25 = sphi 0, %s29
      %p26 = scmp.ge.s32.totalorder %s25, 4
      %s32 = sphi 0, %s44
      %s33 = sphi 0, %s40
      %s34 = sphi 0, %s32
      %s35 = sphi 0, %s33
      %s36 = sphi 0, %s34
      %s37 = sphi 0, %s35
      %s49 = sphi 0, %s51
      %s52 = sphi 0, %s49
      %s53 = sphi 0, %s52
      %s69 = sphi 0, %s53
      %s75 = sphi 0, %s77
      %s78 = sphi 0, %s75
      %s79 = sphi 0, %s78
      %s95 = sphi 0, %s79
      %s99 = sphi 0, %s99
      %s101 = sphi 0, %s99
      %s102 = sphi 0, %s101
      %s116 = sphi 0, %s102
      %s120 = sphi 0, %s120
      %s122 = sphi 0, %s120
      %s123 = sphi 0, %s122
      %s137 = sphi 0, %s123
      %s141 = sphi 0, %s141
      %s143 = sphi 0, %s141
      %s144 = sphi 0, %s143
      %s158 = sphi 0, %s144
      %s162 = sphi 0, %s162
      %s164 = sphi 0, %s162
      %s165 = sphi 0, %s164
      %s179 = sphi 0, %s165
      %s183 = sphi 0, %s183
      %s185 = sphi 0, %s183
      %s186 = sphi 0, %s185
      %s200 = sphi 0, %s186
      %s204 = sphi 0, %s204
      %s206 = sphi 0, %s204
      %s207 = sphi 0, %s206
      %s221 = sphi 0, %s207
      %s225 = sphi 0, %s225
      %s227 = sphi 0, %s225
      %s228 = sphi 0, %s227
      %s242 = sphi 0, %s228
      %s246 = sphi 0, %s246
      %s248 = sphi 0, %s246
      %s249 = sphi 0, %s248
      %s263 = sphi 0, %s249
      %s267 = sphi 0, %s267
      %s269 = sphi 0, %s267
      %s270 = sphi 0, %s269
      %s284 = sphi 0, %s270
      %s288 = sphi 0, %s288
      %s290 = sphi 0, %s288
      %s291 = sphi 0, %s290
      %s305 = sphi 0, %s291
      %s309 = sphi 0, %s309
      %s311 = sphi 0, %s309
      %s312 = sphi 0, %s311
      %s326 = sphi 0, %s312
      %s330 = sphi 0, %s330
      %s332 = sphi 0, %s330
      %s333 = sphi 0, %s332
      %s347 = sphi 0, %s333
      %s351 = sphi 0, %s351
      %s353 = sphi 0, %s351
      %s354 = sphi 0, %s353
      %s368 = sphi 0, %s354
      %s372 = sphi 0, %s372
      %s374 = sphi 0, %s372
      %s375 = sphi 0, %s374
      %s389 = sphi 0, %s375
      %s397 = sphi 0, %s399
      %s400 = sphi 0, %s397
      %s401 = sphi 0, %s400
      %s417 = sphi 0, %s401
    $region4: #{tpu_custom_call.1} parent=1 // loop_header_branch
      %28 = sbr.rel (%p26) target = $region8
    $region5: #{tpu_custom_call.1} parent=1 // loop_body
      %s30 = ssub.s32 %s25, 1
      %s31 = ssub.s32 %s25, 2
      %s38 = sadd.s32 1, %s33
      %p39 = scmp.ge.s32.totalorder %s38, 1
      %s40 = scalar_select %p39, 0, %s38
      %s41 = sadd.s32 1, %s32
      %s42 = scalar_select %p39, %s41, %s32
      %p43 = scmp.ge.s32.totalorder %s42, 2
      %s44 = scalar_select %p43, 0, %s42
      %s45 = ssub.s32 %s32, %s44
      %s46 = ssub.s32 %s33, %s40
      %s47 = sor.u32 %s45, %s46
      %p48 = scmp.eq.s32.totalorder %s47, 0
      %s50 = sadd.s32 %s49, 1
      %s51 = scalar_select %p48, %s49, %s50
      %p54 = pneg %p48
      %p55 = scmp.eq.s32.totalorder %s25, 1
      %p56 = por %p54, %p55
      %p57 = scmp.ne.s32.totalorder %s49, %s52
      %p58 = scmp.eq.s32.totalorder %s25, 0
      %p59 = por %p57, %p58
      %p60 = scmp.ne.s32.totalorder %s49, %s52
      %p61 = scmp.eq.s32.totalorder %s30, 1
      %p62 = por %p60, %p61
      %p63 = scmp.ne.s32.totalorder %s52, %s53
      %p64 = scmp.eq.s32.totalorder %s30, 0
      %p65 = por %p63, %p64
      %p66 = scmp.ne.s32.totalorder %s52, %s53
      %p67 = scmp.eq.s32.totalorder %s31, 1
      %p68 = por %p66, %p67
      %p70 = scmp.ne.s32.totalorder %s53, %s69
      %p71 = scmp.eq.s32.totalorder %s31, 0
      %p72 = por %p70, %p71
      %s73 = ssub.s32 %s32, %s44
      %p74 = scmp.eq.s32.totalorder %s73, 0
      %s76 = sadd.s32 %s75, 1
      %s77 = scalar_select %p74, %s75, %s76
      %p80 = pneg %p74
      %p81 = scmp.eq.s32.totalorder %s25, 1
      %p82 = por %p80, %p81
      %p83 = scmp.ne.s32.totalorder %s75, %s78
      %p84 = scmp.eq.s32.totalorder %s25, 0
      %p85 = por %p83, %p84
      %p86 = scmp.ne.s32.totalorder %s75, %s78
      %p87 = scmp.eq.s32.totalorder %s30, 1
      %p88 = por %p86, %p87
      %p89 = scmp.ne.s32.totalorder %s78, %s79
      %p90 = scmp.eq.s32.totalorder %s30, 0
      %p91 = por %p89, %p90
      %p92 = scmp.ne.s32.totalorder %s78, %s79
      %p93 = scmp.eq.s32.totalorder %s31, 1
      %p94 = por %p92, %p93
      %p96 = scmp.ne.s32.totalorder %s79, %s95
      %p97 = scmp.eq.s32.totalorder %s31, 0
      %p98 = por %p96, %p97
      %s100 = sadd.s32 %s99, 1
      %p103 = scmp.eq.s32.totalorder %s25, 1
      %p104 = scmp.ne.s32.totalorder %s99, %s101
      %p105 = scmp.eq.s32.totalorder %s25, 0
      %p106 = por %p104, %p105
      %p107 = scmp.ne.s32.totalorder %s99, %s101
      %p108 = scmp.eq.s32.totalorder %s30, 1
      %p109 = por %p107, %p108
      %p110 = scmp.ne.s32.totalorder %s101, %s102
      %p111 = scmp.eq.s32.totalorder %s30, 0
      %p112 = por %p110, %p111
      %p113 = scmp.ne.s32.totalorder %s101, %s102
      %p114 = scmp.eq.s32.totalorder %s31, 1
      %p115 = por %p113, %p114
      %p117 = scmp.ne.s32.totalorder %s102, %s116
      %p118 = scmp.eq.s32.totalorder %s31, 0
      %p119 = por %p117, %p118
      %s121 = sadd.s32 %s120, 1
      %p124 = scmp.eq.s32.totalorder %s25, 1
      %p125 = scmp.ne.s32.totalorder %s120, %s122
      %p126 = scmp.eq.s32.totalorder %s25, 0
      %p127 = por %p125, %p126
      %p128 = scmp.ne.s32.totalorder %s120, %s122
      %p129 = scmp.eq.s32.totalorder %s30, 1
      %p130 = por %p128, %p129
      %p131 = scmp.ne.s32.totalorder %s122, %s123
      %p132 = scmp.eq.s32.totalorder %s30, 0
      %p133 = por %p131, %p132
      %p134 = scmp.ne.s32.totalorder %s122, %s123
      %p135 = scmp.eq.s32.totalorder %s31, 1
      %p136 = por %p134, %p135
      %p138 = scmp.ne.s32.totalorder %s123, %s137
      %p139 = scmp.eq.s32.totalorder %s31, 0
      %p140 = por %p138, %p139
      %s142 = sadd.s32 %s141, 1
      %p145 = scmp.eq.s32.totalorder %s25, 1
      %p146 = scmp.ne.s32.totalorder %s141, %s143
      %p147 = scmp.eq.s32.totalorder %s25, 0
      %p148 = por %p146, %p147
      %p149 = scmp.ne.s32.totalorder %s141, %s143
      %p150 = scmp.eq.s32.totalorder %s30, 1
      %p151 = por %p149, %p150
      %p152 = scmp.ne.s32.totalorder %s143, %s144
      %p153 = scmp.eq.s32.totalorder %s30, 0
      %p154 = por %p152, %p153
      %p155 = scmp.ne.s32.totalorder %s143, %s144
      %p156 = scmp.eq.s32.totalorder %s31, 1
      %p157 = por %p155, %p156
      %p159 = scmp.ne.s32.totalorder %s144, %s158
      %p160 = scmp.eq.s32.totalorder %s31, 0
      %p161 = por %p159, %p160
      %s163 = sadd.s32 %s162, 1
      %p166 = scmp.eq.s32.totalorder %s25, 1
      %p167 = scmp.ne.s32.totalorder %s162, %s164
      %p168 = scmp.eq.s32.totalorder %s25, 0
      %p169 = por %p167, %p168
      %p170 = scmp.ne.s32.totalorder %s162, %s164
      %p171 = scmp.eq.s32.totalorder %s30, 1
      %p172 = por %p170, %p171
      %p173 = scmp.ne.s32.totalorder %s164, %s165
      %p174 = scmp.eq.s32.totalorder %s30, 0
      %p175 = por %p173, %p174
      %p176 = scmp.ne.s32.totalorder %s164, %s165
      %p177 = scmp.eq.s32.totalorder %s31, 1
      %p178 = por %p176, %p177
      %p180 = scmp.ne.s32.totalorder %s165, %s179
      %p181 = scmp.eq.s32.totalorder %s31, 0
      %p182 = por %p180, %p181
      %s184 = sadd.s32 %s183, 1
      %p187 = scmp.eq.s32.totalorder %s25, 1
      %p188 = scmp.ne.s32.totalorder %s183, %s185
      %p189 = scmp.eq.s32.totalorder %s25, 0
      %p190 = por %p188, %p189
      %p191 = scmp.ne.s32.totalorder %s183, %s185
      %p192 = scmp.eq.s32.totalorder %s30, 1
      %p193 = por %p191, %p192
      %p194 = scmp.ne.s32.totalorder %s185, %s186
      %p195 = scmp.eq.s32.totalorder %s30, 0
      %p196 = por %p194, %p195
      %p197 = scmp.ne.s32.totalorder %s185, %s186
      %p198 = scmp.eq.s32.totalorder %s31, 1
      %p199 = por %p197, %p198
      %p201 = scmp.ne.s32.totalorder %s186, %s200
      %p202 = scmp.eq.s32.totalorder %s31, 0
      %p203 = por %p201, %p202
      %s205 = sadd.s32 %s204, 1
      %p208 = scmp.eq.s32.totalorder %s25, 1
      %p209 = scmp.ne.s32.totalorder %s204, %s206
      %p210 = scmp.eq.s32.totalorder %s25, 0
      %p211 = por %p209, %p210
      %p212 = scmp.ne.s32.totalorder %s204, %s206
      %p213 = scmp.eq.s32.totalorder %s30, 1
      %p214 = por %p212, %p213
      %p215 = scmp.ne.s32.totalorder %s206, %s207
      %p216 = scmp.eq.s32.totalorder %s30, 0
      %p217 = por %p215, %p216
      %p218 = scmp.ne.s32.totalorder %s206, %s207
      %p219 = scmp.eq.s32.totalorder %s31, 1
      %p220 = por %p218, %p219
      %p222 = scmp.ne.s32.totalorder %s207, %s221
      %p223 = scmp.eq.s32.totalorder %s31, 0
      %p224 = por %p222, %p223
      %s226 = sadd.s32 %s225, 1
      %p229 = scmp.eq.s32.totalorder %s25, 1
      %p230 = scmp.ne.s32.totalorder %s225, %s227
      %p231 = scmp.eq.s32.totalorder %s25, 0
      %p232 = por %p230, %p231
      %p233 = scmp.ne.s32.totalorder %s225, %s227
      %p234 = scmp.eq.s32.totalorder %s30, 1
      %p235 = por %p233, %p234
      %p236 = scmp.ne.s32.totalorder %s227, %s228
      %p237 = scmp.eq.s32.totalorder %s30, 0
      %p238 = por %p236, %p237
      %p239 = scmp.ne.s32.totalorder %s227, %s228
      %p240 = scmp.eq.s32.totalorder %s31, 1
      %p241 = por %p239, %p240
      %p243 = scmp.ne.s32.totalorder %s228, %s242
      %p244 = scmp.eq.s32.totalorder %s31, 0
      %p245 = por %p243, %p244
      %s247 = sadd.s32 %s246, 1
      %p250 = scmp.eq.s32.totalorder %s25, 1
      %p251 = scmp.ne.s32.totalorder %s246, %s248
      %p252 = scmp.eq.s32.totalorder %s25, 0
      %p253 = por %p251, %p252
      %p254 = scmp.ne.s32.totalorder %s246, %s248
      %p255 = scmp.eq.s32.totalorder %s30, 1
      %p256 = por %p254, %p255
      %p257 = scmp.ne.s32.totalorder %s248, %s249
      %p258 = scmp.eq.s32.totalorder %s30, 0
      %p259 = por %p257, %p258
      %p260 = scmp.ne.s32.totalorder %s248, %s249
      %p261 = scmp.eq.s32.totalorder %s31, 1
      %p262 = por %p260, %p261
      %p264 = scmp.ne.s32.totalorder %s249, %s263
      %p265 = scmp.eq.s32.totalorder %s31, 0
      %p266 = por %p264, %p265
      %s268 = sadd.s32 %s267, 1
      %p271 = scmp.eq.s32.totalorder %s25, 1
      %p272 = scmp.ne.s32.totalorder %s267, %s269
      %p273 = scmp.eq.s32.totalorder %s25, 0
      %p274 = por %p272, %p273
      %p275 = scmp.ne.s32.totalorder %s267, %s269
      %p276 = scmp.eq.s32.totalorder %s30, 1
      %p277 = por %p275, %p276
      %p278 = scmp.ne.s32.totalorder %s269, %s270
      %p279 = scmp.eq.s32.totalorder %s30, 0
      %p280 = por %p278, %p279
      %p281 = scmp.ne.s32.totalorder %s269, %s270
      %p282 = scmp.eq.s32.totalorder %s31, 1
      %p283 = por %p281, %p282
      %p285 = scmp.ne.s32.totalorder %s270, %s284
      %p286 = scmp.eq.s32.totalorder %s31, 0
      %p287 = por %p285, %p286
      %s289 = sadd.s32 %s288, 1
      %p292 = scmp.eq.s32.totalorder %s25, 1
      %p293 = scmp.ne.s32.totalorder %s288, %s290
      %p294 = scmp.eq.s32.totalorder %s25, 0
      %p295 = por %p293, %p294
      %p296 = scmp.ne.s32.totalorder %s288, %s290
      %p297 = scmp.eq.s32.totalorder %s30, 1
      %p298 = por %p296, %p297
      %p299 = scmp.ne.s32.totalorder %s290, %s291
      %p300 = scmp.eq.s32.totalorder %s30, 0
      %p301 = por %p299, %p300
      %p302 = scmp.ne.s32.totalorder %s290, %s291
      %p303 = scmp.eq.s32.totalorder %s31, 1
      %p304 = por %p302, %p303
      %p306 = scmp.ne.s32.totalorder %s291, %s305
      %p307 = scmp.eq.s32.totalorder %s31, 0
      %p308 = por %p306, %p307
      %s310 = sadd.s32 %s309, 1
      %p313 = scmp.eq.s32.totalorder %s25, 1
      %p314 = scmp.ne.s32.totalorder %s309, %s311
      %p315 = scmp.eq.s32.totalorder %s25, 0
      %p316 = por %p314, %p315
      %p317 = scmp.ne.s32.totalorder %s309, %s311
      %p318 = scmp.eq.s32.totalorder %s30, 1
      %p319 = por %p317, %p318
      %p320 = scmp.ne.s32.totalorder %s311, %s312
      %p321 = scmp.eq.s32.totalorder %s30, 0
      %p322 = por %p320, %p321
      %p323 = scmp.ne.s32.totalorder %s311, %s312
      %p324 = scmp.eq.s32.totalorder %s31, 1
      %p325 = por %p323, %p324
      %p327 = scmp.ne.s32.totalorder %s312, %s326
      %p328 = scmp.eq.s32.totalorder %s31, 0
      %p329 = por %p327, %p328
      %s331 = sadd.s32 %s330, 1
      %p334 = scmp.eq.s32.totalorder %s25, 1
      %p335 = scmp.ne.s32.totalorder %s330, %s332
      %p336 = scmp.eq.s32.totalorder %s25, 0
      %p337 = por %p335, %p336
      %p338 = scmp.ne.s32.totalorder %s330, %s332
      %p339 = scmp.eq.s32.totalorder %s30, 1
      %p340 = por %p338, %p339
      %p341 = scmp.ne.s32.totalorder %s332, %s333
      %p342 = scmp.eq.s32.totalorder %s30, 0
      %p343 = por %p341, %p342
      %p344 = scmp.ne.s32.totalorder %s332, %s333
      %p345 = scmp.eq.s32.totalorder %s31, 1
      %p346 = por %p344, %p345
      %p348 = scmp.ne.s32.totalorder %s333, %s347
      %p349 = scmp.eq.s32.totalorder %s31, 0
      %p350 = por %p348, %p349
      %s352 = sadd.s32 %s351, 1
      %p355 = scmp.eq.s32.totalorder %s25, 1
      %p356 = scmp.ne.s32.totalorder %s351, %s353
      %p357 = scmp.eq.s32.totalorder %s25, 0
      %p358 = por %p356, %p357
      %p359 = scmp.ne.s32.totalorder %s351, %s353
      %p360 = scmp.eq.s32.totalorder %s30, 1
      %p361 = por %p359, %p360
      %p362 = scmp.ne.s32.totalorder %s353, %s354
      %p363 = scmp.eq.s32.totalorder %s30, 0
      %p364 = por %p362, %p363
      %p365 = scmp.ne.s32.totalorder %s353, %s354
      %p366 = scmp.eq.s32.totalorder %s31, 1
      %p367 = por %p365, %p366
      %p369 = scmp.ne.s32.totalorder %s354, %s368
      %p370 = scmp.eq.s32.totalorder %s31, 0
      %p371 = por %p369, %p370
      %s373 = sadd.s32 %s372, 1
      %p376 = scmp.eq.s32.totalorder %s25, 1
      %p377 = scmp.ne.s32.totalorder %s372, %s374
      %p378 = scmp.eq.s32.totalorder %s25, 0
      %p379 = por %p377, %p378
      %p380 = scmp.ne.s32.totalorder %s372, %s374
      %p381 = scmp.eq.s32.totalorder %s30, 1
      %p382 = por %p380, %p381
      %p383 = scmp.ne.s32.totalorder %s374, %s375
      %p384 = scmp.eq.s32.totalorder %s30, 0
      %p385 = por %p383, %p384
      %p386 = scmp.ne.s32.totalorder %s374, %s375
      %p387 = scmp.eq.s32.totalorder %s31, 1
      %p388 = por %p386, %p387
      %p390 = scmp.ne.s32.totalorder %s375, %s389
      %p391 = scmp.eq.s32.totalorder %s31, 0
      %p392 = por %p390, %p391
      %s393 = ssub.s32 %s32, %s44
      %s394 = ssub.s32 %s33, %s40
      %s395 = sor.u32 %s393, %s394
      %p396 = scmp.eq.s32.totalorder %s395, 0
      %s398 = sadd.s32 %s397, 1
      %s399 = scalar_select %p396, %s397, %s398
      %p402 = pneg %p396
      %p403 = scmp.eq.s32.totalorder %s25, 1
      %p404 = por %p402, %p403
      %p405 = scmp.ne.s32.totalorder %s397, %s400
      %p406 = scmp.eq.s32.totalorder %s25, 0
      %p407 = por %p405, %p406
      %p408 = scmp.ne.s32.totalorder %s397, %s400
      %p409 = scmp.eq.s32.totalorder %s30, 1
      %p410 = por %p408, %p409
      %p411 = scmp.ne.s32.totalorder %s400, %s401
      %p412 = scmp.eq.s32.totalorder %s30, 0
      %p413 = por %p411, %p412
      %p414 = scmp.ne.s32.totalorder %s400, %s401
      %p415 = scmp.eq.s32.totalorder %s31, 1
      %p416 = por %p414, %p415
      %p418 = scmp.ne.s32.totalorder %s401, %s417
      %p419 = scmp.eq.s32.totalorder %s31, 0
      %p420 = por %p418, %p419
      %p421 = scmp.le.s32.totalorder 1, %s25
      %p422 = scmp.lt.s32.totalorder %s25, 3
      %p423 = pnand %p421, %p422
      %p424 = pneg %p423
      // Predicated region
      $region9: #{tpu_custom_call.1} parent=5 // pred_check
        _
      $region10: #{tpu_custom_call.1} parent=5 // pred_check_branch
        %426 = sbr.rel (%p423) target = $region12
      $region11: #{tpu_custom_call.1} parent=5 // pred_region
        %s427 = ssub.s32 %s25, 1
        // Predicated region
        $region13: #{tpu_custom_call.1} parent=11 // pred_check
          %p428 = pneg %p112
        $region14: #{tpu_custom_call.1} parent=11 // pred_check_branch
          %430 = sbr.rel (%p428) target = $region16
        $region15: #{tpu_custom_call.1} parent=11 // pred_region
          _
        $region16: #{tpu_custom_call.1} parent=11 // pred_fallthru
          _
        // Predicated region
        $region17: #{tpu_custom_call.1} parent=11 // pred_check
          %p431 = pneg %p133
        $region18: #{tpu_custom_call.1} parent=11 // pred_check_branch
          %433 = sbr.rel (%p431) target = $region20
        $region19: #{tpu_custom_call.1} parent=11 // pred_region
          _
        $region20: #{tpu_custom_call.1} parent=11 // pred_fallthru
          _
        // Predicated region
        $region21: #{tpu_custom_call.1} parent=11 // pred_check
          %p434 = pneg %p154
        $region22: #{tpu_custom_call.1} parent=11 // pred_check_branch
          %436 = sbr.rel (%p434) target = $region24
        $region23: #{tpu_custom_call.1} parent=11 // pred_region
          _
        $region24: #{tpu_custom_call.1} parent=11 // pred_fallthru
          _
        // Predicated region
        $region25: #{tpu_custom_call.1} parent=11 // pred_check
          %p437 = pneg %p175
        $region26: #{tpu_custom_call.1} parent=11 // pred_check_branch
          %439 = sbr.rel (%p437) target = $region28
        $region27: #{tpu_custom_call.1} parent=11 // pred_region
          _
        $region28: #{tpu_custom_call.1} parent=11 // pred_fallthru
          _
        // Predicated region
        $region29: #{tpu_custom_call.1} parent=11 // pred_check
          %p440 = pneg %p196
        $region30: #{tpu_custom_call.1} parent=11 // pred_check_branch
          %442 = sbr.rel (%p440) target = $region32
        $region31: #{tpu_custom_call.1} parent=11 // pred_region
          _
        $region32: #{tpu_custom_call.1} parent=11 // pred_fallthru
          _
        // Predicated region
        $region33: #{tpu_custom_call.1} parent=11 // pred_check
          %p443 = pneg %p217
        $region34: #{tpu_custom_call.1} parent=11 // pred_check_branch
          %445 = sbr.rel (%p443) target = $region36
        $region35: #{tpu_custom_call.1} parent=11 // pred_region
          _
        $region36: #{tpu_custom_call.1} parent=11 // pred_fallthru
          _
        // Predicated region
        $region37: #{tpu_custom_call.1} parent=11 // pred_check
          %p446 = pneg %p238
        $region38: #{tpu_custom_call.1} parent=11 // pred_check_branch
          %448 = sbr.rel (%p446) target = $region40
        $region39: #{tpu_custom_call.1} parent=11 // pred_region
          _
        $region40: #{tpu_custom_call.1} parent=11 // pred_fallthru
          _
        // Predicated region
        $region41: #{tpu_custom_call.1} parent=11 // pred_check
          %p449 = pneg %p259
        $region42: #{tpu_custom_call.1} parent=11 // pred_check_branch
          %451 = sbr.rel (%p449) target = $region44
        $region43: #{tpu_custom_call.1} parent=11 // pred_region
          _
        $region44: #{tpu_custom_call.1} parent=11 // pred_fallthru
          _
        // Predicated region
        $region45: #{tpu_custom_call.1} parent=11 // pred_check
          %p452 = pneg %p280
        $region46: #{tpu_custom_call.1} parent=11 // pred_check_branch
          %454 = sbr.rel (%p452) target = $region48
        $region47: #{tpu_custom_call.1} parent=11 // pred_region
          _
        $region48: #{tpu_custom_call.1} parent=11 // pred_fallthru
          _
        // Predicated region
        $region49: #{tpu_custom_call.1} parent=11 // pred_check
          %p455 = pneg %p301
        $region50: #{tpu_custom_call.1} parent=11 // pred_check_branch
          %457 = sbr.rel (%p455) target = $region52
        $region51: #{tpu_custom_call.1} parent=11 // pred_region
          _
        $region52: #{tpu_custom_call.1} parent=11 // pred_fallthru
          _
        // Predicated region
        $region53: #{tpu_custom_call.1} parent=11 // pred_check
          %p458 = pneg %p322
        $region54: #{tpu_custom_call.1} parent=11 // pred_check_branch
          %460 = sbr.rel (%p458) target = $region56
        $region55: #{tpu_custom_call.1} parent=11 // pred_region
          _
        $region56: #{tpu_custom_call.1} parent=11 // pred_fallthru
          _
        // Predicated region
        $region57: #{tpu_custom_call.1} parent=11 // pred_check
          %p461 = pneg %p343
        $region58: #{tpu_custom_call.1} parent=11 // pred_check_branch
          %463 = sbr.rel (%p461) target = $region60
        $region59: #{tpu_custom_call.1} parent=11 // pred_region
          _
        $region60: #{tpu_custom_call.1} parent=11 // pred_fallthru
          _
        // Predicated region
        $region61: #{tpu_custom_call.1} parent=11 // pred_check
          %p464 = pneg %p364
        $region62: #{tpu_custom_call.1} parent=11 // pred_check_branch
          %466 = sbr.rel (%p464) target = $region64
        $region63: #{tpu_custom_call.1} parent=11 // pred_region
          _
        $region64: #{tpu_custom_call.1} parent=11 // pred_fallthru
          _
        // Predicated region
        $region65: #{tpu_custom_call.1} parent=11 // pred_check
          %p467 = pneg %p385
        $region66: #{tpu_custom_call.1} parent=11 // pred_check_branch
          %469 = sbr.rel (%p467) target = $region68
        $region67: #{tpu_custom_call.1} parent=11 // pred_region
          _
        $region68: #{tpu_custom_call.1} parent=11 // pred_fallthru
          _
      $region12: #{tpu_custom_call.1} parent=5 // pred_fallthru
        _
      %p470 = scmp.lt.s32.totalorder %s25, 2
      // Predicated region
      $region69: #{tpu_custom_call.1} parent=5 // pred_check
        %p471 = pneg %p470
      $region70: #{tpu_custom_call.1} parent=5 // pred_check_branch
        %473 = sbr.rel (%p471) target = $region72
      $region71: #{tpu_custom_call.1} parent=5 // pred_region
        // Predicated region
        $region73: #{tpu_custom_call.1} parent=71 // pred_check
          %p474 = pneg %p59
        $region74: #{tpu_custom_call.1} parent=71 // pred_check_branch
          %476 = sbr.rel (%p474) target = $region76
        $region75: #{tpu_custom_call.1} parent=71 // pred_region
          %s477 = smul.u32 2, %s33
          %p478 = scmp.lt.s32.totalorder %s32, 1
          %s479 = scalar_select %p478, %s32, 1
          %p480 = scmp.lt.s32.totalorder %s477, 1
          %s481 = scalar_select %p480, %s477, 1
          %s482 = smul.addr %s479, 2
          %s483 = sadd.s32 %s481, %s482
          %s484 = smul.addr %s483, 8
          %s485 = scalar_lea.vmem %s0, %s484
          %s486 = smul.u32 2, %s33
        $region76: #{tpu_custom_call.1} parent=71 // pred_fallthru
          _
        // Predicated region
        $region77: #{tpu_custom_call.1} parent=71 // pred_check
          %p487 = pneg %p85
        $region78: #{tpu_custom_call.1} parent=71 // pred_check_branch
          %489 = sbr.rel (%p487) target = $region80
        $region79: #{tpu_custom_call.1} parent=71 // pred_region
          %p490 = scmp.lt.s32.totalorder %s32, 1
          %s491 = scalar_select %p490, %s32, 1
          %s492 = smul.addr %s491, 8
          %s493 = scalar_lea.vmem %s1, %s492
        $region80: #{tpu_custom_call.1} parent=71 // pred_fallthru
          _
      $region72: #{tpu_custom_call.1} parent=5 // pred_fallthru
        _
      %p494 = scmp.le.s32.totalorder 1, %s25
      %p495 = scmp.lt.s32.totalorder %s25, 3
      %p496 = pnand %p494, %p495
      %p497 = pneg %p496
      // Predicated region
      $region81: #{tpu_custom_call.1} parent=5 // pred_check
        _
      $region82: #{tpu_custom_call.1} parent=5 // pred_check_branch
        %499 = sbr.rel (%p496) target = $region84
      $region83: #{tpu_custom_call.1} parent=5 // pred_region
        %s500 = ssub.s32 %s25, 1
        %s501 = smul.u32 2, %s35
        %p502 = scmp.lt.s32.totalorder %s34, 1
        %s503 = scalar_select %p502, %s34, 1
        %p504 = scmp.lt.s32.totalorder %s501, 1
        %s505 = scalar_select %p504, %s501, 1
        %s506 = smul.addr %s503, 2
        %s507 = sadd.s32 %s505, %s506
        %s508 = smul.addr %s507, 8
        %s509 = scalar_lea.vmem %s0, %s508
        %p510 = pneg %p65
        %p511 = pneg %p62
        %p512 = scmp.lt.s32.totalorder %s34, 1
        %s513 = scalar_select %p512, %s34, 1
        %s514 = smul.addr %s513, 8
        %s515 = scalar_lea.vmem %s1, %s514
        %p516 = pneg %p91
        %p517 = pneg %p88
        %p518 = pneg %p112
        %p519 = pneg %p109
        %p520 = pneg %p133
        %p521 = pneg %p130
        %p522 = pneg %p154
        %p523 = pneg %p151
        %p524 = pneg %p175
        %p525 = pneg %p172
        %p526 = pneg %p196
        %p527 = pneg %p193
        %p528 = pneg %p217
        %p529 = pneg %p214
        %p530 = pneg %p238
        %p531 = pneg %p235
        %p532 = pneg %p259
        %p533 = pneg %p256
        %p534 = pneg %p280
        %p535 = pneg %p277
        %p536 = pneg %p301
        %p537 = pneg %p298
        %p538 = pneg %p322
        %p539 = pneg %p319
        %p540 = pneg %p343
        %p541 = pneg %p340
        %p542 = pneg %p364
        %p543 = pneg %p361
        %p544 = pneg %p385
        %p545 = pneg %p382
        %p546 = pneg %p413
        %p547 = pneg %p410
        %s548 = sand.u32 %s400, 1
        %s549 = scalar_lea.sflag [#allocation7], %s548
        %s550 = sand.u32 %s400, 1
        %s551 = smul.addr %s550, 16
        %s552 = scalar_lea.vmem [#allocation6], %s551
        %s553 = smul.u32 2, %s35
        %p554 = scmp.lt.s32.totalorder %s34, 1
        %s555 = scalar_select %p554, %s34, 1
        %p556 = scmp.lt.s32.totalorder %s553, 1
        %s557 = scalar_select %p556, %s553, 1
        %s558 = smul.addr %s555, 2
        %s559 = sadd.s32 %s557, %s558
        %s560 = smul.addr %s559, 8
        %s561 = scalar_lea.vmem %s0, %s560
        %s562 = smul.u32 2, %s35
        %p563 = scmp.lt.s32.totalorder %s34, 1
        %s564 = scalar_select %p563, %s34, 1
        %s565 = smul.addr %s564, 8
        %s566 = scalar_lea.vmem %s1, %s565
        %s567 = smul.u32 2, %s35
        %p569 = scmp.eq.s32.totalorder %s35, 0
        // Predicated region
        $region85: #{tpu_custom_call.1} parent=83 // pred_check
          %p570 = pneg %p569
        $region86: #{tpu_custom_call.1} parent=83 // pred_check_branch
          %572 = sbr.rel (%p570) target = $region88
        $region87: #{tpu_custom_call.1} parent=83 // pred_region
          %v573 = vld [vmem:[%s566] sm:$0xff]
          %vm574 = vcmask 261120
          %v575 = vsel %vm574, %v573, 0.0
          %576 = vadd.xlane.f32.xlu0 %v575
          %v577 = vpop.xlane.xlu0 %576
          %v578 = vrcp.pop 32.0
          %v579 = vmul.f32 %v577, %v578
          %v580 = vsub.f32 %v573, %v579
          %v581 = vmul.f32 %v580, %v580
          %v582 = vsel %vm574, %v581, 0.0
          %583 = vadd.xlane.f32.xlu0 %v582
          %v584 = vpop.xlane.xlu0 %583
          %v585 = vmul.f32 %v584, %v578
          %v586 = vadd.f32 %v585, 1e-05
          %v587 = vrsqrt.pop %v586
          %v588 = vmul.f32 %v580, %v587
          %v589 = vld [vmem:[%s2] sm:$0x1]
          %v591 = vlaneseq
          %v592 = vshrl.u32 %v591, 7
          %v593 = vsub.s32 0, %v592
          %v594 = vrot.slane %v589, %v593
          %v596 = vmul.f32 %v588, %v594
          %v597 = vld [vmem:[%s3] sm:$0x1]
          %v599 = vlaneseq
          %v600 = vshrl.u32 %v599, 7
          %v601 = vsub.s32 0, %v600
          %v602 = vrot.slane %v597, %v601
          %v604 = vadd.f32 %v596, %v602
          %v605 = vpack.c.bf16 %v604, %v604
          %v606 = vld [vmem:[%s6] sm:$0xf]
          %v607 = vld [vmem:[%s6 + $0x4] sm:$0xf]
          %v608 = vld [vmem:[%s6 + $0x8] sm:$0xf]
          %v609 = vld [vmem:[%s6 + $0xc] sm:$0xf]
          %v610 = vld [vmem:[%s7] sm:$0x1]
          %v612 = vlaneseq
          %v613 = vshrl.u32 %v612, 7
          %v614 = vsub.s32 0, %v613
          %v615 = vrot.slane %v610, %v614
          %v621 = vunpack.c.l.b16 %v606
          %v622 = vunpack.c.l.b16 %v607
          %v623 = vunpack.c.l.b16 %v608
          %v624 = vunpack.c.l.b16 %v609
          %v625 = vpack.c.b16 %v622, %v621
          %v626 = vpack.c.b16 %v624, %v623
          %v630 = vsel %vm574, %v605, 0
          %632 = vmatprep.subr.bf16.mxu0 0
          %633 = vmatpush1.bf16.msra.mxu0 %v625
          %634 = vmatprep.subr.bf16.mxu0 0
          %635 = vmatpush1.bf16.msra.mxu0 %v626
          %636 = vmatprep.subr.bf16.mxu0 0
          %637 = vmatpush1.bf16.msra.mxu0 0
          %638 = vmatprep.subr.bf16.mxu0 0
          %639 = vmatpush1.bf16.msra.mxu0 0
          %640 = vmatprep.subr.bf16.mxu0 0
          %641 = vmatpush1.bf16.msra.mxu0 0
          %642 = vmatprep.subr.bf16.mxu0 0
          %643 = vmatpush1.bf16.msra.mxu0 0
          %644 = vmatprep.subr.bf16.mxu0 0
          %645 = vmatpush1.bf16.msra.mxu0 0
          %646 = vmatprep.subr.bf16.mxu0 0
          %647 = vmatpush1.bf16.msra.mxu0 0
          %648 = vmatprep.subr.bf16.mxu0 0
          %649 = vmatpush1.bf16.msra.mxu0 0
          %650 = vmatprep.subr.bf16.mxu0 0
          %651 = vmatpush1.bf16.msra.mxu0 0
          %652 = vmatprep.subr.bf16.mxu0 0
          %653 = vmatpush1.bf16.msra.mxu0 0
          %654 = vmatprep.subr.bf16.mxu0 0
          %655 = vmatpush1.bf16.msra.mxu0 0
          %656 = vmatprep.subr.bf16.mxu0 0
          %657 = vmatpush1.bf16.msra.mxu0 0
          %658 = vmatprep.subr.bf16.mxu0 0
          %659 = vmatpush1.bf16.msra.mxu0 0
          %660 = vmatprep.subr.bf16.mxu0 0
          %661 = vmatpush1.bf16.msra.mxu0 0
          %662 = vmatprep.subr.bf16.mxu0 0
          %663 = vmatpush1.bf16.msra.mxu0 0
          %664 = vmatprep.mubr.bf16.mxu0 0
          %665 = vmatmul.mubr.bf16.gmra.mrb[0].mxu0 %v630
          %v666 = vpop.f32.mrb[0].mxu0
          %v667 = vadd.f32 %v615, %v666
          %v668 = vpop.f32.mrb[0].mxu0
          %v669 = vpop.f32.mrb[0].mxu0
          %v670 = vpop.f32.mrb[0].mxu0
          %671 = vdwg.mxu0
          %v672 = vld [vmem:[%s8] sm:$0xf]
          %v673 = vld [vmem:[%s8 + $0x4] sm:$0xf]
          %v674 = vld [vmem:[%s8 + $0x8] sm:$0xf]
          %v675 = vld [vmem:[%s8 + $0xc] sm:$0xf]
          %v676 = vld [vmem:[%s9] sm:$0x1]
          %v678 = vlaneseq
          %v679 = vshrl.u32 %v678, 7
          %v680 = vsub.s32 0, %v679
          %v681 = vrot.slane %v676, %v680
          %v687 = vunpack.c.l.b16 %v672
          %v688 = vunpack.c.l.b16 %v673
          %v689 = vunpack.c.l.b16 %v674
          %v690 = vunpack.c.l.b16 %v675
          %v691 = vpack.c.b16 %v688, %v687
          %v692 = vpack.c.b16 %v690, %v689
          %695 = vmatprep.subr.bf16.mxu0 0
          %696 = vmatpush1.bf16.msra.mxu0 %v691
          %697 = vmatprep.subr.bf16.mxu0 0
          %698 = vmatpush1.bf16.msra.mxu0 %v692
          %699 = vmatprep.subr.bf16.mxu0 0
          %700 = vmatpush1.bf16.msra.mxu0 0
          %701 = vmatprep.subr.bf16.mxu0 0
          %702 = vmatpush1.bf16.msra.mxu0 0
          %703 = vmatprep.subr.bf16.mxu0 0
          %704 = vmatpush1.bf16.msra.mxu0 0
          %705 = vmatprep.subr.bf16.mxu0 0
          %706 = vmatpush1.bf16.msra.mxu0 0
          %707 = vmatprep.subr.bf16.mxu0 0
          %708 = vmatpush1.bf16.msra.mxu0 0
          %709 = vmatprep.subr.bf16.mxu0 0
          %710 = vmatpush1.bf16.msra.mxu0 0
          %711 = vmatprep.subr.bf16.mxu0 0
          %712 = vmatpush1.bf16.msra.mxu0 0
          %713 = vmatprep.subr.bf16.mxu0 0
          %714 = vmatpush1.bf16.msra.mxu0 0
          %715 = vmatprep.subr.bf16.mxu0 0
          %716 = vmatpush1.bf16.msra.mxu0 0
          %717 = vmatprep.subr.bf16.mxu0 0
          %718 = vmatpush1.bf16.msra.mxu0 0
          %719 = vmatprep.subr.bf16.mxu0 0
          %720 = vmatpush1.bf16.msra.mxu0 0
          %721 = vmatprep.subr.bf16.mxu0 0
          %722 = vmatpush1.bf16.msra.mxu0 0
          %723 = vmatprep.subr.bf16.mxu0 0
          %724 = vmatpush1.bf16.msra.mxu0 0
          %725 = vmatprep.subr.bf16.mxu0 0
          %726 = vmatpush1.bf16.msra.mxu0 0
          %727 = vmatprep.mubr.bf16.mxu0 0
          %728 = vmatmul.mubr.bf16.gmra.mrb[0].mxu0 %v630
          %v729 = vpop.f32.mrb[0].mxu0
          %v730 = vadd.f32 %v681, %v729
          %v731 = vpop.f32.mrb[0].mxu0
          %v732 = vpop.f32.mrb[0].mxu0
          %v733 = vpop.f32.mrb[0].mxu0
          %734 = vdwg.mxu0
          %v735 = vpack.c.bf16 %v667, %v667
          %736 = vst [vmem:[#allocation2] sm:$0xf] %v735
          %v737 = vpack.c.bf16 %v730, %v730
          %738 = vst [vmem:[#allocation3] sm:$0xf] %v737
        $region88: #{tpu_custom_call.1} parent=83 // pred_fallthru
          _
        %v739 = vld [vmem:[%s561] sm:$0xff]
        %v740 = vld [vmem:[%s561 + $0x8] sm:$0xff]
        %vm741 = vcmask 261120
        %v742 = vsel %vm741, %v739, 0.0
        %743 = vadd.xlane.f32.xlu0 %v742
        %v744 = vpop.xlane.xlu0 %743
        %v745 = vsel %vm741, %v740, 0.0
        %746 = vadd.xlane.f32.xlu0 %v745
        %v747 = vpop.xlane.xlu0 %746
        %v748 = vrcp.pop 32.0
        %v749 = vmul.f32 %v744, %v748
        %v750 = vmul.f32 %v747, %v748
        %v751 = vsub.f32 %v739, %v749
        %v752 = vsub.f32 %v740, %v750
        %v753 = vmul.f32 %v751, %v751
        %v754 = vmul.f32 %v752, %v752
        %v755 = vsel %vm741, %v753, 0.0
        %756 = vadd.xlane.f32.xlu0 %v755
        %v757 = vpop.xlane.xlu0 %756
        %v758 = vsel %vm741, %v754, 0.0
        %759 = vadd.xlane.f32.xlu0 %v758
        %v760 = vpop.xlane.xlu0 %759
        %v761 = vmul.f32 %v757, %v748
        %v762 = vmul.f32 %v760, %v748
        %v763 = vadd.f32 %v761, 1e-06
        %v764 = vadd.f32 %v762, 1e-06
        %v765 = vrsqrt.pop %v763
        %v766 = vrsqrt.pop %v764
        %v767 = vmul.f32 %v751, %v765
        %v768 = vmul.f32 %v752, %v766
        %v769 = vpack.c.bf16 %v768, %v767
        %v770 = vld [vmem:[%s4] sm:$0xf]
        %v771 = vld [vmem:[%s4 + $0x4] sm:$0xf]
        %v772 = vld [vmem:[%s4 + $0x8] sm:$0xf]
        %v773 = vld [vmem:[%s4 + $0xc] sm:$0xf]
        %v774 = vld [vmem:[%s5] sm:$0x1]
        %v776 = vlaneseq
        %v777 = vshrl.u32 %v776, 7
        %v778 = vsub.s32 0, %v777
        %v779 = vrot.slane %v774, %v778
        %v785 = vunpack.c.l.b16 %v770
        %v786 = vunpack.c.l.b16 %v771
        %v787 = vunpack.c.l.b16 %v772
        %v788 = vunpack.c.l.b16 %v773
        %v789 = vpack.c.b16 %v786, %v785
        %v790 = vpack.c.b16 %v788, %v787
        %v794 = vsel %vm741, %v769, 0
        %796 = vmatprep.subr.bf16.mxu0 0
        %797 = vmatpush1.bf16.msra.mxu0 %v789
        %798 = vmatprep.subr.bf16.mxu0 0
        %799 = vmatpush1.bf16.msra.mxu0 %v790
        %800 = vmatprep.subr.bf16.mxu0 0
        %801 = vmatpush1.bf16.msra.mxu0 0
        %802 = vmatprep.subr.bf16.mxu0 0
        %803 = vmatpush1.bf16.msra.mxu0 0
        %804 = vmatprep.subr.bf16.mxu0 0
        %805 = vmatpush1.bf16.msra.mxu0 0
        %806 = vmatprep.subr.bf16.mxu0 0
        %807 = vmatpush1.bf16.msra.mxu0 0
        %808 = vmatprep.subr.bf16.mxu0 0
        %809 = vmatpush1.bf16.msra.mxu0 0
        %810 = vmatprep.subr.bf16.mxu0 0
        %811 = vmatpush1.bf16.msra.mxu0 0
        %812 = vmatprep.subr.bf16.mxu0 0
        %813 = vmatpush1.bf16.msra.mxu0 0
        %814 = vmatprep.subr.bf16.mxu0 0
        %815 = vmatpush1.bf16.msra.mxu0 0
        %816 = vmatprep.subr.bf16.mxu0 0
        %817 = vmatpush1.bf16.msra.mxu0 0
        %818 = vmatprep.subr.bf16.mxu0 0
        %819 = vmatpush1.bf16.msra.mxu0 0
        %820 = vmatprep.subr.bf16.mxu0 0
        %821 = vmatpush1.bf16.msra.mxu0 0
        %822 = vmatprep.subr.bf16.mxu0 0
        %823 = vmatpush1.bf16.msra.mxu0 0
        %824 = vmatprep.subr.bf16.mxu0 0
        %825 = vmatpush1.bf16.msra.mxu0 0
        %826 = vmatprep.subr.bf16.mxu0 0
        %827 = vmatpush1.bf16.msra.mxu0 0
        %828 = vmatprep.mubr.bf16.mxu0 0
        %829 = vmatmul.mubr.bf16.gmra.mrb[0].mxu0 %v794
        %v830 = vpop.f32.mrb[0].mxu0
        %v831 = vadd.f32 %v779, %v830
        %v832 = vpop.f32.mrb[0].mxu0
        %v833 = vpop.f32.mrb[0].mxu0
        %v834 = vadd.f32 %v779, %v833
        %v835 = vpop.f32.mrb[0].mxu0
        %836 = vdwg.mxu0
        %v837 = vpack.c.bf16 %v834, %v831
        %838 = vst [vmem:[#allocation4] sm:$0xff] %v837
        %v839 = vld [vmem:[#allocation4] sm:$0xff]
        %v840 = vld [vmem:[#allocation2] sm:$0xf]
        %v841 = vld [vmem:[#allocation3] sm:$0xf]
        %842 = vmatprep.subr.bf16.mxu0 0
        %843 = vmatpush1.bf16.xpose.msra.mxu0 %v840
        %844 = vmatprep.subr.bf16.mxu0 0
        %845 = vmatpush1.bf16.xpose.msra.mxu0 0
        %846 = vmatprep.subr.bf16.mxu0 0
        %847 = vmatpush1.bf16.xpose.msra.mxu0 0
        %848 = vmatprep.subr.bf16.mxu0 0
        %849 = vmatpush1.bf16.xpose.msra.mxu0 0
        %850 = vmatprep.subr.bf16.mxu0 0
        %851 = vmatpush1.bf16.xpose.msra.mxu0 0
        %852 = vmatprep.subr.bf16.mxu0 0
        %853 = vmatpush1.bf16.xpose.msra.mxu0 0
        %854 = vmatprep.subr.bf16.mxu0 0
        %855 = vmatpush1.bf16.xpose.msra.mxu0 0
        %856 = vmatprep.subr.bf16.mxu0 0
        %857 = vmatpush1.bf16.xpose.msra.mxu0 0
        %858 = vmatprep.subr.bf16.mxu0 0
        %859 = vmatpush1.bf16.xpose.msra.mxu0 0
        %860 = vmatprep.subr.bf16.mxu0 0
        %861 = vmatpush1.bf16.xpose.msra.mxu0 0
        %862 = vmatprep.subr.bf16.mxu0 0
        %863 = vmatpush1.bf16.xpose.msra.mxu0 0
        %864 = vmatprep.subr.bf16.mxu0 0
        %865 = vmatpush1.bf16.xpose.msra.mxu0 0
        %866 = vmatprep.subr.bf16.mxu0 0
        %867 = vmatpush1.bf16.xpose.msra.mxu0 0
        %868 = vmatprep.subr.bf16.mxu0 0
        %869 = vmatpush1.bf16.xpose.msra.mxu0 0
        %870 = vmatprep.subr.bf16.mxu0 0
        %871 = vmatpush1.bf16.xpose.msra.mxu0 0
        %872 = vmatprep.subr.bf16.mxu0 0
        %873 = vmatpush1.bf16.xpose.msra.mxu0 0
        %874 = vmatprep.mubr.bf16.mxu0 0
        %875 = vmatmul.mubr.bf16.gmra.mrb[0].mxu0 %v839
        %v876 = vpop.f32.mrb[0].mxu0
        %v877 = vadd.f32 0.0, %v876
        %v878 = vpop.f32.mrb[0].mxu0
        %v879 = vpop.f32.mrb[0].mxu0
        %v880 = vadd.f32 0.0, %v879
        %v881 = vpop.f32.mrb[0].mxu0
        %882 = vdwg.mxu0
        %vm883 = vcmask 64512
        %v884 = vsel %vm883, %v877, -inf
        %885 = vmax.xlane.f32.xlu0 %v884
        %v886 = vpop.xlane.xlu0 %885
        %v887 = vsel %vm883, %v880, -inf
        %888 = vmax.xlane.f32.xlu0 %v887
        %v889 = vpop.xlane.xlu0 %888
        %v890 = vsub.f32 %v877, %v886
        %v891 = vsub.f32 %v880, %v889
        %v892 = vmul.f32 %v890, 1.442695
        %v893 = vpow.pop %v892
        %v894 = vmul.f32 %v891, 1.442695
        %v895 = vpow.pop %v894
        %v896 = vsel %vm883, %v893, 0.0
        %897 = vadd.xlane.f32.xlu0 %v896
        %v898 = vpop.xlane.xlu0 %897
        %v899 = vsel %vm883, %v895, 0.0
        %900 = vadd.xlane.f32.xlu0 %v899
        %v901 = vpop.xlane.xlu0 %900
        %v902 = vrcp.pop %v898
        %v903 = vrcp.pop %v901
        %v904 = vmul.f32 %v893, %v902
        %v905 = vmul.f32 %v895, %v903
        %v906 = vpack.c.bf16 %v905, %v904
        %v908 = vsel %vm883, %v906, 0
        %vm910 = vcmask 1043456
        %v912 = vsel %vm910, %v841, 0
        %914 = vmatprep.subr.bf16.mxu0 0
        %915 = vmatpush1.bf16.msra.mxu0 %v912
        %916 = vmatprep.subr.bf16.mxu0 0
        %917 = vmatpush1.bf16.msra.mxu0 0
        %918 = vmatprep.subr.bf16.mxu0 0
        %919 = vmatpush1.bf16.msra.mxu0 0
        %920 = vmatprep.subr.bf16.mxu0 0
        %921 = vmatpush1.bf16.msra.mxu0 0
        %922 = vmatprep.subr.bf16.mxu0 0
        %923 = vmatpush1.bf16.msra.mxu0 0
        %924 = vmatprep.subr.bf16.mxu0 0
        %925 = vmatpush1.bf16.msra.mxu0 0
        %926 = vmatprep.subr.bf16.mxu0 0
        %927 = vmatpush1.bf16.msra.mxu0 0
        %928 = vmatprep.subr.bf16.mxu0 0
        %929 = vmatpush1.bf16.msra.mxu0 0
        %930 = vmatprep.subr.bf16.mxu0 0
        %931 = vmatpush1.bf16.msra.mxu0 0
        %932 = vmatprep.subr.bf16.mxu0 0
        %933 = vmatpush1.bf16.msra.mxu0 0
        %934 = vmatprep.subr.bf16.mxu0 0
        %935 = vmatpush1.bf16.msra.mxu0 0
        %936 = vmatprep.subr.bf16.mxu0 0
        %937 = vmatpush1.bf16.msra.mxu0 0
        %938 = vmatprep.subr.bf16.mxu0 0
        %939 = vmatpush1.bf16.msra.mxu0 0
        %940 = vmatprep.subr.bf16.mxu0 0
        %941 = vmatpush1.bf16.msra.mxu0 0
        %942 = vmatprep.subr.bf16.mxu0 0
        %943 = vmatpush1.bf16.msra.mxu0 0
        %944 = vmatprep.subr.bf16.mxu0 0
        %945 = vmatpush1.bf16.msra.mxu0 0
        %946 = vmatprep.mubr.bf16.mxu0 0
        %947 = vmatmul.mubr.bf16.gmra.mrb[0].mxu0 %v908
        %v948 = vpop.f32.mrb[0].mxu0
        %v949 = vadd.f32 0.0, %v948
        %v950 = vpop.f32.mrb[0].mxu0
        %v951 = vpop.f32.mrb[0].mxu0
        %v952 = vadd.f32 0.0, %v951
        %v953 = vpop.f32.mrb[0].mxu0
        %954 = vdwg.mxu0
        %v955 = vpack.c.bf16 %v952, %v949
        %956 = vst [vmem:[#allocation5] sm:$0xff] %v955
        %v957 = vld [vmem:[#allocation5] sm:$0xff]
        %v958 = vld [vmem:[%s10] sm:$0xf]
        %v959 = vld [vmem:[%s10 + $0x4] sm:$0xf]
        %v960 = vld [vmem:[%s10 + $0x8] sm:$0xf]
        %v961 = vld [vmem:[%s10 + $0xc] sm:$0xf]
        %v962 = vld [vmem:[%s10 + $0x10] sm:$0xf]
        %v963 = vld [vmem:[%s10 + $0x14] sm:$0xf]
        %v964 = vld [vmem:[%s10 + $0x18] sm:$0xf]
        %v965 = vld [vmem:[%s10 + $0x1c] sm:$0xf]
        %v966 = vld [vmem:[%s10 + $0x20] sm:$0xf]
        %v967 = vld [vmem:[%s10 + $0x24] sm:$0xf]
        %v968 = vld [vmem:[%s10 + $0x28] sm:$0xf]
        %v969 = vld [vmem:[%s10 + $0x2c] sm:$0xf]
        %v970 = vld [vmem:[%s10 + $0x30] sm:$0xf]
        %v971 = vld [vmem:[%s10 + $0x34] sm:$0xf]
        %v972 = vld [vmem:[%s10 + $0x38] sm:$0xf]
        %v973 = vld [vmem:[%s10 + $0x3c] sm:$0xf]
        %v974 = vld [vmem:[%s11] sm:$0x1]
        %v976 = vlaneseq
        %v977 = vshrl.u32 %v976, 7
        %v978 = vsub.s32 0, %v977
        %v979 = vrot.slane %v974, %v978
        %v997 = vunpack.c.l.b16 %v958
        %v998 = vunpack.c.l.b16 %v959
        %v999 = vunpack.c.l.b16 %v960
        %v1000 = vunpack.c.l.b16 %v961
        %v1001 = vunpack.c.l.b16 %v962
        %v1002 = vunpack.c.l.b16 %v963
        %v1003 = vunpack.c.l.b16 %v964
        %v1004 = vunpack.c.l.b16 %v965
        %v1005 = vunpack.c.l.b16 %v966
        %v1006 = vunpack.c.l.b16 %v967
        %v1007 = vunpack.c.l.b16 %v968
        %v1008 = vunpack.c.l.b16 %v969
        %v1009 = vunpack.c.l.b16 %v970
        %v1010 = vunpack.c.l.b16 %v971
        %v1011 = vunpack.c.l.b16 %v972
        %v1012 = vunpack.c.l.b16 %v973
        %v1013 = vpack.c.b16 %v998, %v997
        %v1014 = vpack.c.b16 %v1000, %v999
        %v1015 = vpack.c.b16 %v1002, %v1001
        %v1016 = vpack.c.b16 %v1004, %v1003
        %v1017 = vpack.c.b16 %v1006, %v1005
        %v1018 = vpack.c.b16 %v1008, %v1007
        %v1019 = vpack.c.b16 %v1010, %v1009
        %v1020 = vpack.c.b16 %v1012, %v1011
        %1029 = vmatprep.subr.bf16.mxu0 0
        %1030 = vmatpush1.bf16.msra.mxu0 %v1013
        %1031 = vmatprep.subr.bf16.mxu0 0
        %1032 = vmatpush1.bf16.msra.mxu0 %v1014
        %1033 = vmatprep.subr.bf16.mxu0 0
        %1034 = vmatpush1.bf16.msra.mxu0 %v1015
        %1035 = vmatprep.subr.bf16.mxu0 0
        %1036 = vmatpush1.bf16.msra.mxu0 %v1016
        %1037 = vmatprep.subr.bf16.mxu0 0
        %1038 = vmatpush1.bf16.msra.mxu0 %v1017
        %1039 = vmatprep.subr.bf16.mxu0 0
        %1040 = vmatpush1.bf16.msra.mxu0 %v1018
        %1041 = vmatprep.subr.bf16.mxu0 0
        %1042 = vmatpush1.bf16.msra.mxu0 %v1019
        %1043 = vmatprep.subr.bf16.mxu0 0
        %1044 = vmatpush1.bf16.msra.mxu0 %v1020
        %1045 = vmatprep.subr.bf16.mxu0 0
        %1046 = vmatpush1.bf16.msra.mxu0 0
        %1047 = vmatprep.subr.bf16.mxu0 0
        %1048 = vmatpush1.bf16.msra.mxu0 0
        %1049 = vmatprep.subr.bf16.mxu0 0
        %1050 = vmatpush1.bf16.msra.mxu0 0
        %1051 = vmatprep.subr.bf16.mxu0 0
        %1052 = vmatpush1.bf16.msra.mxu0 0
        %1053 = vmatprep.subr.bf16.mxu0 0
        %1054 = vmatpush1.bf16.msra.mxu0 0
        %1055 = vmatprep.subr.bf16.mxu0 0
        %1056 = vmatpush1.bf16.msra.mxu0 0
        %1057 = vmatprep.subr.bf16.mxu0 0
        %1058 = vmatpush1.bf16.msra.mxu0 0
        %1059 = vmatprep.subr.bf16.mxu0 0
        %1060 = vmatpush1.bf16.msra.mxu0 0
        %1061 = vmatprep.mubr.bf16.mxu0 0
        %1062 = vmatmul.mubr.bf16.gmra.mrb[0].mxu0 %v957
        %v1063 = vpop.f32.mrb[0].mxu0
        %v1064 = vadd.f32 %v979, %v1063
        %v1065 = vpop.f32.mrb[0].mxu0
        %v1066 = vpop.f32.mrb[0].mxu0
        %v1067 = vadd.f32 %v979, %v1066
        %v1068 = vpop.f32.mrb[0].mxu0
        %1069 = vdwg.mxu0
        %v1070 = vadd.f32 %v739, %v1064
        %v1071 = vadd.f32 %v740, %v1067
        %v1072 = vsel %vm741, %v1070, 0.0
        %1073 = vadd.xlane.f32.xlu0 %v1072
        %v1074 = vpop.xlane.xlu0 %1073
        %v1075 = vsel %vm741, %v1071, 0.0
        %1076 = vadd.xlane.f32.xlu0 %v1075
        %v1077 = vpop.xlane.xlu0 %1076
        %v1078 = vmul.f32 %v1074, %v748
        %v1079 = vmul.f32 %v1077, %v748
        %v1080 = vsub.f32 %v1070, %v1078
        %v1081 = vsub.f32 %v1071, %v1079
        %v1082 = vmul.f32 %v1080, %v1080
        %v1083 = vmul.f32 %v1081, %v1081
        %v1084 = vsel %vm741, %v1082, 0.0
        %1085 = vadd.xlane.f32.xlu0 %v1084
        %v1086 = vpop.xlane.xlu0 %1085
        %v1087 = vsel %vm741, %v1083, 0.0
        %1088 = vadd.xlane.f32.xlu0 %v1087
        %v1089 = vpop.xlane.xlu0 %1088
        %v1090 = vmul.f32 %v1086, %v748
        %v1091 = vmul.f32 %v1089, %v748
        %v1092 = vadd.f32 %v1090, 1e-06
        %v1093 = vadd.f32 %v1091, 1e-06
        %v1094 = vrsqrt.pop %v1092
        %v1095 = vrsqrt.pop %v1093
        %v1096 = vmul.f32 %v1080, %v1094
        %v1097 = vmul.f32 %v1081, %v1095
        %v1098 = vpack.c.bf16 %v1097, %v1096
        %v1099 = vld [vmem:[%s12] sm:$0xf]
        %v1100 = vld [vmem:[%s12 + $0x4] sm:$0xf]
        %v1101 = vld [vmem:[%s12 + $0x8] sm:$0xf]
        %v1102 = vld [vmem:[%s12 + $0xc] sm:$0xf]
        %v1103 = vld [vmem:[%s13] sm:$0x1]
        %v1105 = vlaneseq
        %v1106 = vshrl.u32 %v1105, 7
        %v1107 = vsub.s32 0, %v1106
        %v1108 = vrot.slane %v1103, %v1107
        %v1114 = vunpack.c.l.b16 %v1099
        %v1115 = vunpack.c.l.b16 %v1100
        %v1116 = vunpack.c.l.b16 %v1101
        %v1117 = vunpack.c.l.b16 %v1102
        %v1118 = vpack.c.b16 %v1115, %v1114
        %v1119 = vpack.c.b16 %v1117, %v1116
        %v1123 = vsel %vm741, %v1098, 0
        %1125 = vmatprep.subr.bf16.mxu0 0
        %1126 = vmatpush1.bf16.msra.mxu0 %v1118
        %1127 = vmatprep.subr.bf16.mxu0 0
        %1128 = vmatpush1.bf16.msra.mxu0 %v1119
        %1129 = vmatprep.subr.bf16.mxu0 0
        %1130 = vmatpush1.bf16.msra.mxu0 0
        %1131 = vmatprep.subr.bf16.mxu0 0
        %1132 = vmatpush1.bf16.msra.mxu0 0
        %1133 = vmatprep.subr.bf16.mxu0 0
        %1134 = vmatpush1.bf16.msra.mxu0 0
        %1135 = vmatprep.subr.bf16.mxu0 0
        %1136 = vmatpush1.bf16.msra.mxu0 0
        %1137 = vmatprep.subr.bf16.mxu0 0
        %1138 = vmatpush1.bf16.msra.mxu0 0
        %1139 = vmatprep.subr.bf16.mxu0 0
        %1140 = vmatpush1.bf16.msra.mxu0 0
        %1141 = vmatprep.subr.bf16.mxu0 0
        %1142 = vmatpush1.bf16.msra.mxu0 0
        %1143 = vmatprep.subr.bf16.mxu0 0
        %1144 = vmatpush1.bf16.msra.mxu0 0
        %1145 = vmatprep.subr.bf16.mxu0 0
        %1146 = vmatpush1.bf16.msra.mxu0 0
        %1147 = vmatprep.subr.bf16.mxu0 0
        %1148 = vmatpush1.bf16.msra.mxu0 0
        %1149 = vmatprep.subr.bf16.mxu0 0
        %1150 = vmatpush1.bf16.msra.mxu0 0
        %1151 = vmatprep.subr.bf16.mxu0 0
        %1152 = vmatpush1.bf16.msra.mxu0 0
        %1153 = vmatprep.subr.bf16.mxu0 0
        %1154 = vmatpush1.bf16.msra.mxu0 0
        %1155 = vmatprep.subr.bf16.mxu0 0
        %1156 = vmatpush1.bf16.msra.mxu0 0
        %1157 = vmatprep.mubr.bf16.mxu0 0
        %1158 = vmatmul.mubr.bf16.gmra.mrb[0].mxu0 %v1123
        %v1159 = vpop.f32.mrb[0].mxu0
        %v1160 = vadd.f32 %v1108, %v1159
        %v1161 = vpop.f32.mrb[0].mxu0
        %v1162 = vpop.f32.mrb[0].mxu0
        %v1163 = vadd.f32 %v1108, %v1162
        %v1164 = vpop.f32.mrb[0].mxu0
        %1165 = vdwg.mxu0
        %v1166 = vmul.f32 %v1160, 0.5
        %v1167 = vmul.f32 %v1163, 0.5
        %v1168 = vmul.f32 %v1160, 0.044715
        %v1169 = vmul.f32 %v1163, 0.044715
        %v1170 = vmul.f32 %v1168, %v1160
        %v1171 = vmul.f32 %v1169, %v1163
        %v1172 = vmul.f32 %v1170, %v1160
        %v1173 = vmul.f32 %v1171, %v1163
        %v1174 = vadd.f32 %v1160, %v1172
        %v1175 = vadd.f32 %v1163, %v1173
        %v1176 = vmul.f32 %v1174, 0.7978846
        %v1177 = vmul.f32 %v1175, 0.7978846
        %v1178 = vtanh.pop %v1176
        %v1179 = vtanh.pop %v1177
        %v1180 = vadd.f32 %v1178, 1.0
        %v1181 = vadd.f32 %v1179, 1.0
        %v1182 = vmul.f32 %v1166, %v1180
        %v1183 = vmul.f32 %v1167, %v1181
        %v1184 = vpack.c.bf16 %v1183, %v1182
        %v1185 = vld [vmem:[%s14] sm:$0xf]
        %v1186 = vld [vmem:[%s14 + $0x4] sm:$0xf]
        %v1187 = vld [vmem:[%s14 + $0x8] sm:$0xf]
        %v1188 = vld [vmem:[%s14 + $0xc] sm:$0xf]
        %v1189 = vld [vmem:[%s14 + $0x10] sm:$0xf]
        %v1190 = vld [vmem:[%s14 + $0x14] sm:$0xf]
        %v1191 = vld [vmem:[%s14 + $0x18] sm:$0xf]
        %v1192 = vld [vmem:[%s14 + $0x1c] sm:$0xf]
        %v1193 = vld [vmem:[%s14 + $0x20] sm:$0xf]
        %v1194 = vld [vmem:[%s14 + $0x24] sm:$0xf]
        %v1195 = vld [vmem:[%s14 + $0x28] sm:$0xf]
        %v1196 = vld [vmem:[%s14 + $0x2c] sm:$0xf]
        %v1197 = vld [vmem:[%s14 + $0x30] sm:$0xf]
        %v1198 = vld [vmem:[%s14 + $0x34] sm:$0xf]
        %v1199 = vld [vmem:[%s14 + $0x38] sm:$0xf]
        %v1200 = vld [vmem:[%s14 + $0x3c] sm:$0xf]
        %v1201 = vld [vmem:[%s15] sm:$0x1]
        %v1203 = vlaneseq
        %v1204 = vshrl.u32 %v1203, 7
        %v1205 = vsub.s32 0, %v1204
        %v1206 = vrot.slane %v1201, %v1205
        %v1224 = vunpack.c.l.b16 %v1185
        %v1225 = vunpack.c.l.b16 %v1186
        %v1226 = vunpack.c.l.b16 %v1187
        %v1227 = vunpack.c.l.b16 %v1188
        %v1228 = vunpack.c.l.b16 %v1189
        %v1229 = vunpack.c.l.b16 %v1190
        %v1230 = vunpack.c.l.b16 %v1191
        %v1231 = vunpack.c.l.b16 %v1192
        %v1232 = vunpack.c.l.b16 %v1193
        %v1233 = vunpack.c.l.b16 %v1194
        %v1234 = vunpack.c.l.b16 %v1195
        %v1235 = vunpack.c.l.b16 %v1196
        %v1236 = vunpack.c.l.b16 %v1197
        %v1237 = vunpack.c.l.b16 %v1198
        %v1238 = vunpack.c.l.b16 %v1199
        %v1239 = vunpack.c.l.b16 %v1200
        %v1240 = vpack.c.b16 %v1225, %v1224
        %v1241 = vpack.c.b16 %v1227, %v1226
        %v1242 = vpack.c.b16 %v1229, %v1228
        %v1243 = vpack.c.b16 %v1231, %v1230
        %v1244 = vpack.c.b16 %v1233, %v1232
        %v1245 = vpack.c.b16 %v1235, %v1234
        %v1246 = vpack.c.b16 %v1237, %v1236
        %v1247 = vpack.c.b16 %v1239, %v1238
        %1256 = vmatprep.subr.bf16.mxu0 0
        %1257 = vmatpush1.bf16.msra.mxu0 %v1240
        %1258 = vmatprep.subr.bf16.mxu0 0
        %1259 = vmatpush1.bf16.msra.mxu0 %v1241
        %1260 = vmatprep.subr.bf16.mxu0 0
        %1261 = vmatpush1.bf16.msra.mxu0 %v1242
        %1262 = vmatprep.subr.bf16.mxu0 0
        %1263 = vmatpush1.bf16.msra.mxu0 %v1243
        %1264 = vmatprep.subr.bf16.mxu0 0
        %1265 = vmatpush1.bf16.msra.mxu0 %v1244
        %1266 = vmatprep.subr.bf16.mxu0 0
        %1267 = vmatpush1.bf16.msra.mxu0 %v1245
        %1268 = vmatprep.subr.bf16.mxu0 0
        %1269 = vmatpush1.bf16.msra.mxu0 %v1246
        %1270 = vmatprep.subr.bf16.mxu0 0
        %1271 = vmatpush1.bf16.msra.mxu0 %v1247
        %1272 = vmatprep.subr.bf16.mxu0 0
        %1273 = vmatpush1.bf16.msra.mxu0 0
        %1274 = vmatprep.subr.bf16.mxu0 0
        %1275 = vmatpush1.bf16.msra.mxu0 0
        %1276 = vmatprep.subr.bf16.mxu0 0
        %1277 = vmatpush1.bf16.msra.mxu0 0
        %1278 = vmatprep.subr.bf16.mxu0 0
        %1279 = vmatpush1.bf16.msra.mxu0 0
        %1280 = vmatprep.subr.bf16.mxu0 0
        %1281 = vmatpush1.bf16.msra.mxu0 0
        %1282 = vmatprep.subr.bf16.mxu0 0
        %1283 = vmatpush1.bf16.msra.mxu0 0
        %1284 = vmatprep.subr.bf16.mxu0 0
        %1285 = vmatpush1.bf16.msra.mxu0 0
        %1286 = vmatprep.subr.bf16.mxu0 0
        %1287 = vmatpush1.bf16.msra.mxu0 0
        %1288 = vmatprep.mubr.bf16.mxu0 0
        %1289 = vmatmul.mubr.bf16.gmra.mrb[0].mxu0 %v1184
        %v1290 = vpop.f32.mrb[0].mxu0
        %v1291 = vadd.f32 %v1206, %v1290
        %v1292 = vpop.f32.mrb[0].mxu0
        %v1293 = vpop.f32.mrb[0].mxu0
        %v1294 = vadd.f32 %v1206, %v1293
        %v1295 = vpop.f32.mrb[0].mxu0
        %1296 = vdwg.mxu0
        %v1297 = vadd.f32 %v1070, %v1291
        %v1298 = vadd.f32 %v1071, %v1294
        %1299 = vst.msk [vmem:[%s552] sm:$0xff] %vm741, %v1297
        %1300 = vst.msk [vmem:[%s552 + $0x8] sm:$0xff] %vm741, %v1298
        %s1301 = sand.u32 %s400, 1
        %s1302 = scalar_lea.sflag [#allocation7], %s1301
        %s1303 = sand.u32 %s400, 1
        %s1304 = smul.addr %s1303, 16
        %s1305 = scalar_lea.vmem [#allocation6], %s1304
        // Predicated region
        $region89: #{tpu_custom_call.1} parent=83 // pred_check
          %p1306 = pneg %p410
        $region90: #{tpu_custom_call.1} parent=83 // pred_check_branch
          %1308 = sbr.rel (%p1306) target = $region92
        $region91: #{tpu_custom_call.1} parent=83 // pred_region
          %s1309 = smul.u32 2, %s35
          %s1311 = ssub.s32 256, 256
          %1312 = vsyncadd %s1302, %s1311
          %s1313 = smul.addr %s34, 2
          %s1314 = sadd.s32 %s1309, %s1313
          %s1315 = smul.addr %s1314, 128
          %s1316 = scalar_lea.hbm %s16, %s1315
          %s1317 = sshll.u32 %s1305, 4
          %s1318 = int_to_ptr.vmem [resolvable:$true] %s1317
          %1323 = dma.vmem_to_hbm [thread:$0]  %s1318, 256, %s1316, %s1302, 128, 128, 8
        $region92: #{tpu_custom_call.1} parent=83 // pred_fallthru
          _
      $region84: #{tpu_custom_call.1} parent=5 // pred_fallthru
        _
      %p1324 = scmp.le.s32.totalorder 2, %s25
      // Predicated region
      $region93: #{tpu_custom_call.1} parent=5 // pred_check
        %p1325 = pneg %p1324
      $region94: #{tpu_custom_call.1} parent=5 // pred_check_branch
        %1327 = sbr.rel (%p1325) target = $region96
      $region95: #{tpu_custom_call.1} parent=5 // pred_region
        %s1328 = ssub.s32 %s25, 2
        // Predicated region
        $region97: #{tpu_custom_call.1} parent=95 // pred_check
          %p1329 = pneg %p416
        $region98: #{tpu_custom_call.1} parent=95 // pred_check_branch
          %1331 = sbr.rel (%p1329) target = $region100
        $region99: #{tpu_custom_call.1} parent=95 // pred_region
          %s1332 = sand.u32 %s401, 1
          %s1333 = scalar_lea.sflag [#allocation7], %s1332
          %s1334 = sand.u32 %s401, 1
          %s1335 = smul.addr %s1334, 16
          %s1336 = scalar_lea.vmem [#allocation6], %s1335
          %1337 = dma.done %s1333, 256
        $region100: #{tpu_custom_call.1} parent=95 // pred_fallthru
          _
      $region96: #{tpu_custom_call.1} parent=5 // pred_fallthru
        _
    $region6: #{tpu_custom_call.1} parent=1 // loop_footer
      %s29 = sadd.s32 1, %s25
    $region7: #{tpu_custom_call.1} parent=1 // loop_footer_branch
      %24 = sbr.rel target = $region3
    $region8: #{tpu_custom_call.1} parent=1 // loop_exit
      _
    %1338 = vsyncpa [#allocation7], 1
    %s1339 = scalar_lea.sflag [#allocation7], 1
    %1340 = vsyncpa %s1339, 1

</llo_original>
